<compile_context>
chip_gen: v7x
topology: tpu7x:2x2x1
jax: 0.10.0
libtpu: 0.0.40
codegen_flags: <defaults>
</compile_context>

<pallas_src>
import functools

import jax
import jax.numpy as jnp
from jax import lax
from jax.experimental import pallas as pl
from jax.experimental.pallas import tpu as pltpu

K = 4
STRIDE = 2
PAD = 1
NEG_SLOPE = 0.2


def _make_kernel(TH, W, Cin, Cout, neg_slope):
    HW = TH * W

    def kernel(x_ref, w_ref, b_ref, o_ref):
        # x_ref: (Cin, H+2, W+2)   1-padded input image (one batch element), NCHW order
        # w_ref: (4, Cout, 4*Cin)  per-phase weight slabs, contraction ordered (dh, dw, ci)
        # b_ref: (Cout, 1)         bias (fp32)
        # o_ref: (4, Cout, TH*W)   per-phase outputs of this row tile (lane-dense last dim)
        t = pl.program_id(1)
        r0 = pl.multiple_of(t * TH, TH)

        # The 16 logical taps only touch 9 distinct (row_offset, col_offset) windows:
        # slice + relayout each once, reuse across the 4 phases.
        slab = {}
        for ro in range(3):
            for co in range(3):
                sl = x_ref[:, pl.ds(r0 + ro, TH), co:co + W]   # (Cin, TH, W)
                slab[(ro, co)] = sl.reshape(Cin, HW)           # (Cin, TH*W)

        bias = b_ref[...]                                      # (Cout, 1), hoisted
        for ph in range(2):                                    # output row phase
            for pw in range(2):                                # output col phase
                patch = jnp.concatenate(
                    [slab[(ph + dh, pw + dw)] for dh in range(2) for dw in range(2)],
                    axis=0)                                    # (4*Cin, TH*W)
                acc = jnp.dot(w_ref[2 * ph + pw], patch,
                              preferred_element_type=jnp.float32)   # (Cout, TH*W) fp32
                acc = acc + bias                               # bias broadcast over lanes
                acc = jnp.where(acc > 0, acc, neg_slope * acc)  # LeakyReLU(0.2)
                o_ref[2 * ph + pw, :, :] = acc.astype(o_ref.dtype)

    return kernel


def _pick_tile_h(H, W, Cin, Cout, cd_bytes, out_bytes):
    """Largest row tile dividing H whose flattened spatial extent is lane-dense (multiple
    of 128) and whose per-step working set fits a conservative VMEM budget. Falls back to
    the smallest lane-dense divisor, then to the full height (full-extent last dim is
    always a legal block)."""
    budget = 8 * 1024 * 1024   # per-step working-set target (default scoped VMEM ~32 MiB)

    def step_bytes(d):
        hw = d * W
        return hw * (4 * Cout * out_bytes       # 4-phase output block
                     + Cout * 4                 # fp32 accumulator
                     + 13 * Cin * cd_bytes)     # 9 tap slabs + one 4-slab patch

    cands = [d for d in range(1, H + 1) if H % d == 0 and (d * W) % 128 == 0]
    fits = [d for d in cands if step_bytes(d) <= budget]
    if fits:
        return max(fits)
    if cands:
        return min(cands)
    return H


@functools.partial(jax.jit, static_argnames=("compute_dtype",))
def up_block(x, weight, bias, compute_dtype=jnp.bfloat16):
    """x: (N, Cin, H, W) NCHW; weight: (Cin, Cout, 4, 4) torch ConvTranspose2d layout;
    bias: (Cout,). Returns (N, Cout, 2H, 2W). compute_dtype = MXU input dtype
    (bf16 recommended on v6e/v7x; accumulation is always fp32)."""
    N, Cin, H, W = x.shape
    Cout = weight.shape[1]
    TH = _pick_tile_h(H, W, Cin, Cout,
                      jnp.dtype(compute_dtype).itemsize, x.dtype.itemsize)
    n_tiles = H // TH

    # 1-pixel zero pad covers the ih=-1 / ih=H (and iw) taps; keep NCHW (no transpose).
    xp = jnp.pad(x, ((0, 0), (0, 0), (1, 1), (1, 1))).astype(compute_dtype)
    Hp, Wp = H + 2, W + 2

    # Per-phase weight slabs:
    #   slab[2*ph+pw, co, (2*dh+dw)*Cin + ci] = weight[ci, co, 3-ph-2*dh, 3-pw-2*dw]
    slabs = []
    for ph in range(2):
        for pw in range(2):
            taps = [weight[:, :, 3 - ph - 2 * dh, 3 - pw - 2 * dw]     # (Cin, Cout)
                    for dh in range(2) for dw in range(2)]
            slabs.append(jnp.stack(taps, 0).reshape(4 * Cin, Cout).T)  # (Cout, 4*Cin)
    w_slab = jnp.stack(slabs, 0).astype(compute_dtype)                 # (4, Cout, 4*Cin)
    b2 = bias.reshape(Cout, 1).astype(jnp.float32)

    kernel = _make_kernel(TH, W, Cin, Cout, NEG_SLOPE)
    out_ph = pl.pallas_call(
        kernel,
        out_shape=jax.ShapeDtypeStruct((N, 4, Cout, H * W), x.dtype),
        grid_spec=pltpu.PrefetchScalarGridSpec(
            num_scalar_prefetch=0,
            grid=(N, n_tiles),
            in_specs=[
                # whole padded image per batch element; block index is t-invariant so it
                # is DMA'd once per n and kept resident across row tiles.
                pl.BlockSpec((None, Cin, Hp, Wp), lambda n, t: (n, 0, 0, 0)),
                # weights / bias: grid-invariant -> resident for the whole kernel.
                pl.BlockSpec((4, Cout, 4 * Cin), lambda n, t: (0, 0, 0)),
                pl.BlockSpec((Cout, 1), lambda n, t: (0, 0)),
            ],
            out_specs=pl.BlockSpec((None, 4, Cout, TH * W), lambda n, t: (n, 0, 0, t)),
        ),
        compiler_params=pltpu.CompilerParams(
            dimension_semantics=("parallel", "parallel")),
    )(xp, w_slab, b2)

    # Interleave the 4 phases back into NCHW:
    #   out[n, co, 2i+ph, 2j+pw] = out_ph[n, 2ph+pw, co, i*W + j]
    out = out_ph.reshape(N, 2, 2, Cout, H, W)
    out = out.transpose(0, 3, 4, 1, 5, 2).reshape(N, Cout, 2 * H, 2 * W)
    return out


def reference(x, weight, bias):
    """Pure-JAX reference: ConvTranspose2d(4,2,1) + LeakyReLU(0.2) in NCHW."""
    wf = jnp.flip(weight, axis=(2, 3)).transpose(1, 0, 2, 3)  # (Cout, Cin, K, K)
    y = lax.conv_general_dilated(
        x, wf, window_strides=(1, 1),
        padding=((K - 1 - PAD, K - 1 - PAD), (K - 1 - PAD, K - 1 - PAD)),
        lhs_dilation=(STRIDE, STRIDE),
        dimension_numbers=('NCHW', 'OIHW', 'NCHW'))
    y = y + bias[None, :, None, None]
    return jnp.where(y > 0, y, NEG_SLOPE * y)


if __name__ == "__main__":
    key = jax.random.PRNGKey(0)
    kx, kw, kb = jax.random.split(key, 3)

    N, Cin, Cout, H, W = 2, 4, 8, 16, 16
    x = jax.random.normal(kx, (N, Cin, H, W), jnp.float32)

    # Deterministic synthetic parameters (shapes per nn.ConvTranspose2d(Cin, Cout, 4, 2, 1))
    bound = 1.0 / (Cin * K * K) ** 0.5
    weight = jax.random.uniform(kw, (Cin, Cout, K, K), jnp.float32, -bound, bound)
    bias = jax.random.uniform(kb, (Cout,), jnp.float32, -bound, bound)

    y_ref = reference(x, weight, bias)

    # fp32 MXU path (exactness check against the reference).
    y32 = jax.block_until_ready(up_block(x, weight, bias, compute_dtype=jnp.float32))
    assert y32.shape == (N, Cout, STRIDE * H, STRIDE * W), y32.shape
    assert jnp.allclose(y32, y_ref, atol=1e-4, rtol=1e-4), \
        float(jnp.max(jnp.abs(y32 - y_ref)))

    # bf16 MXU path (v6e/v7x recommendation): fp32 accumulation, relaxed tolerance.
    y16 = jax.block_until_ready(up_block(x, weight, bias, compute_dtype=jnp.bfloat16))
    assert y16.shape == (N, Cout, STRIDE * H, STRIDE * W), y16.shape
    assert jnp.allclose(y16, y_ref, atol=5e-2, rtol=5e-2), \
        float(jnp.max(jnp.abs(y16 - y_ref)))

    print("KERNEL_OK")
</pallas_src>

<mosaic_0001>
module attributes {stable_mosaic.version = 11 : i64} {
  func.func @kernel(%arg0: i32, %arg1: i32, %arg2: memref<1x4x18x18xf32, #tpu.memory_space<vmem>>, %arg3: memref<4x8x16xf32, #tpu.memory_space<vmem>>, %arg4: memref<8x1xf32, #tpu.memory_space<vmem>>, %arg5: memref<1x4x8x256xf32, #tpu.memory_space<vmem>>) attributes {dimension_semantics = [#tpu.dimension_semantics<parallel>, #tpu.dimension_semantics<parallel>], iteration_bounds = array<i64: 2, 1>, scalar_prefetch = 0 : i64, scratch_operands = 0 : i64, tpu.core_type = #tpu.core_type<tc>, window_params = [{transform_indices = @transform_0, window_bounds = array<i64: 1, 4, 18, 18>}, {pipeline_mode = #tpu.pipeline_mode<synchronous>, transform_indices = @transform_1, window_bounds = array<i64: 4, 8, 16>}, {pipeline_mode = #tpu.pipeline_mode<synchronous>, transform_indices = @transform_2, window_bounds = array<i64: 8, 1>}, {transform_indices = @transform_3, window_bounds = array<i64: 1, 4, 8, 256>}]} {
    %c16_i32 = arith.constant 16 : i32
    %0 = arith.muli %arg1, %c16_i32 : i32
    %1 = tpu.assume_multiple %0, 16 : i32
    %c0_i32 = arith.constant 0 : i32
    %2 = arith.addi %1, %c0_i32 : i32
    %c0 = arith.constant 0 : index
    %c0_0 = arith.constant 0 : index
    %3 = arith.index_cast %2 : i32 to index
    %c0_1 = arith.constant 0 : index
    %4 = vector.load %arg2[%c0, %c0_0, %3, %c0_1] : memref<1x4x18x18xf32, #tpu.memory_space<vmem>>, vector<1x4x16x16xf32>
    %5 = vector.shape_cast %4 : vector<1x4x16x16xf32> to vector<4x16x16xf32>
    %6 = vector.shape_cast %5 : vector<4x16x16xf32> to vector<4x256xf32>
    %c0_i32_2 = arith.constant 0 : i32
    %7 = arith.addi %1, %c0_i32_2 : i32
    %c0_3 = arith.constant 0 : index
    %c0_4 = arith.constant 0 : index
    %8 = arith.index_cast %7 : i32 to index
    %c1 = arith.constant 1 : index
    %9 = vector.load %arg2[%c0_3, %c0_4, %8, %c1] : memref<1x4x18x18xf32, #tpu.memory_space<vmem>>, vector<1x4x16x16xf32>
    %10 = vector.shape_cast %9 : vector<1x4x16x16xf32> to vector<4x16x16xf32>
    %11 = vector.shape_cast %10 : vector<4x16x16xf32> to vector<4x256xf32>
    %c0_i32_5 = arith.constant 0 : i32
    %12 = arith.addi %1, %c0_i32_5 : i32
    %c0_6 = arith.constant 0 : index
    %c0_7 = arith.constant 0 : index
    %13 = arith.index_cast %12 : i32 to index
    %c2 = arith.constant 2 : index
    %14 = vector.load %arg2[%c0_6, %c0_7, %13, %c2] : memref<1x4x18x18xf32, #tpu.memory_space<vmem>>, vector<1x4x16x16xf32>
    %15 = vector.shape_cast %14 : vector<1x4x16x16xf32> to vector<4x16x16xf32>
    %16 = vector.shape_cast %15 : vector<4x16x16xf32> to vector<4x256xf32>
    %c1_i32 = arith.constant 1 : i32
    %17 = arith.addi %1, %c1_i32 : i32
    %c0_8 = arith.constant 0 : index
    %c0_9 = arith.constant 0 : index
    %18 = arith.index_cast %17 : i32 to index
    %c0_10 = arith.constant 0 : index
    %19 = vector.load %arg2[%c0_8, %c0_9, %18, %c0_10] : memref<1x4x18x18xf32, #tpu.memory_space<vmem>>, vector<1x4x16x16xf32>
    %20 = vector.shape_cast %19 : vector<1x4x16x16xf32> to vector<4x16x16xf32>
    %21 = vector.shape_cast %20 : vector<4x16x16xf32> to vector<4x256xf32>
    %c1_i32_11 = arith.constant 1 : i32
    %22 = arith.addi %1, %c1_i32_11 : i32
    %c0_12 = arith.constant 0 : index
    %c0_13 = arith.constant 0 : index
    %23 = arith.index_cast %22 : i32 to index
    %c1_14 = arith.constant 1 : index
    %24 = vector.load %arg2[%c0_12, %c0_13, %23, %c1_14] : memref<1x4x18x18xf32, #tpu.memory_space<vmem>>, vector<1x4x16x16xf32>
    %25 = vector.shape_cast %24 : vector<1x4x16x16xf32> to vector<4x16x16xf32>
    %26 = vector.shape_cast %25 : vector<4x16x16xf32> to vector<4x256xf32>
    %c1_i32_15 = arith.constant 1 : i32
    %27 = arith.addi %1, %c1_i32_15 : i32
    %c0_16 = arith.constant 0 : index
    %c0_17 = arith.constant 0 : index
    %28 = arith.index_cast %27 : i32 to index
    %c2_18 = arith.constant 2 : index
    %29 = vector.load %arg2[%c0_16, %c0_17, %28, %c2_18] : memref<1x4x18x18xf32, #tpu.memory_space<vmem>>, vector<1x4x16x16xf32>
    %30 = vector.shape_cast %29 : vector<1x4x16x16xf32> to vector<4x16x16xf32>
    %31 = vector.shape_cast %30 : vector<4x16x16xf32> to vector<4x256xf32>
    %c2_i32 = arith.constant 2 : i32
    %32 = arith.addi %1, %c2_i32 : i32
    %c0_19 = arith.constant 0 : index
    %c0_20 = arith.constant 0 : index
    %33 = arith.index_cast %32 : i32 to index
    %c0_21 = arith.constant 0 : index
    %34 = vector.load %arg2[%c0_19, %c0_20, %33, %c0_21] : memref<1x4x18x18xf32, #tpu.memory_space<vmem>>, vector<1x4x16x16xf32>
    %35 = vector.shape_cast %34 : vector<1x4x16x16xf32> to vector<4x16x16xf32>
    %36 = vector.shape_cast %35 : vector<4x16x16xf32> to vector<4x256xf32>
    %c2_i32_22 = arith.constant 2 : i32
    %37 = arith.addi %1, %c2_i32_22 : i32
    %c0_23 = arith.constant 0 : index
    %c0_24 = arith.constant 0 : index
    %38 = arith.index_cast %37 : i32 to index
    %c1_25 = arith.constant 1 : index
    %39 = vector.load %arg2[%c0_23, %c0_24, %38, %c1_25] : memref<1x4x18x18xf32, #tpu.memory_space<vmem>>, vector<1x4x16x16xf32>
    %40 = vector.shape_cast %39 : vector<1x4x16x16xf32> to vector<4x16x16xf32>
    %41 = vector.shape_cast %40 : vector<4x16x16xf32> to vector<4x256xf32>
    %c2_i32_26 = arith.constant 2 : i32
    %42 = arith.addi %1, %c2_i32_26 : i32
    %c0_27 = arith.constant 0 : index
    %c0_28 = arith.constant 0 : index
    %43 = arith.index_cast %42 : i32 to index
    %c2_29 = arith.constant 2 : index
    %44 = vector.load %arg2[%c0_27, %c0_28, %43, %c2_29] : memref<1x4x18x18xf32, #tpu.memory_space<vmem>>, vector<1x4x16x16xf32>
    %45 = vector.shape_cast %44 : vector<1x4x16x16xf32> to vector<4x16x16xf32>
    %46 = vector.shape_cast %45 : vector<4x16x16xf32> to vector<4x256xf32>
    %c0_30 = arith.constant 0 : index
    %c0_31 = arith.constant 0 : index
    %47 = vector.load %arg4[%c0_30, %c0_31] : memref<8x1xf32, #tpu.memory_space<vmem>>, vector<8x1xf32>
    %48 = tpu.concatenate %6, %11, %21, %26 in 0 : vector<4x256xf32>, vector<4x256xf32>, vector<4x256xf32>, vector<4x256xf32> -> vector<16x256xf32>
    %c0_32 = arith.constant 0 : index
    %c0_33 = arith.constant 0 : index
    %c0_34 = arith.constant 0 : index
    %49 = vector.load %arg3[%c0_32, %c0_33, %c0_34] : memref<4x8x16xf32, #tpu.memory_space<vmem>>, vector<1x8x16xf32>
    %50 = vector.shape_cast %49 : vector<1x8x16xf32> to vector<8x16xf32>
    %cst = arith.constant dense<0.000000e+00> : vector<8x256xf32>
    %51 = tpu.matmul %50, %48, %cst {dimension_numbers = #tpu.dot_dimension_numbers<[1], [0], [0], [1], [0, 0, 1, 1], [], []>} : vector<8x16xf32>, vector<16x256xf32>, vector<8x256xf32> -> vector<8x256xf32>
    %52 = vector.broadcast %47 : vector<8x1xf32> to vector<8x256xf32>
    %53 = arith.addf %51, %52 : vector<8x256xf32>
    %cst_35 = arith.constant 0.000000e+00 : f32
    %54 = vector.broadcast %cst_35 : f32 to vector<8x256xf32>
    %55 = arith.cmpf ogt, %53, %54 : vector<8x256xf32>
    %cst_36 = arith.constant 2.000000e-01 : f32
    %56 = vector.broadcast %cst_36 : f32 to vector<8x256xf32>
    %57 = arith.mulf %56, %53 : vector<8x256xf32>
    %58 = arith.select %55, %53, %57 : vector<8x256xi1>, vector<8x256xf32>
    %c0_37 = arith.constant 0 : index
    %c0_38 = arith.constant 0 : index
    %c0_39 = arith.constant 0 : index
    %c0_40 = arith.constant 0 : index
    %59 = vector.load %arg5[%c0_37, %c0_38, %c0_39, %c0_40] : memref<1x4x8x256xf32, #tpu.memory_space<vmem>>, vector<1x1x8x256xf32>
    %60 = vector.shape_cast %59 : vector<1x1x8x256xf32> to vector<8x256xf32>
    %61 = vector.shape_cast %58 : vector<8x256xf32> to vector<1x1x8x256xf32>
    tpu.vector_store %arg5[%c0_37, %c0_38, %c0_39, %c0_40], %61 {strides = array<i32>} : memref<1x4x8x256xf32, #tpu.memory_space<vmem>>, vector<1x1x8x256xf32>,
    %62 = tpu.concatenate %11, %16, %26, %31 in 0 : vector<4x256xf32>, vector<4x256xf32>, vector<4x256xf32>, vector<4x256xf32> -> vector<16x256xf32>
    %c1_41 = arith.constant 1 : index
    %c0_42 = arith.constant 0 : index
    %c0_43 = arith.constant 0 : index
    %63 = vector.load %arg3[%c1_41, %c0_42, %c0_43] : memref<4x8x16xf32, #tpu.memory_space<vmem>>, vector<1x8x16xf32>
    %64 = vector.shape_cast %63 : vector<1x8x16xf32> to vector<8x16xf32>
    %cst_44 = arith.constant dense<0.000000e+00> : vector<8x256xf32>
    %65 = tpu.matmul %64, %62, %cst_44 {dimension_numbers = #tpu.dot_dimension_numbers<[1], [0], [0], [1], [0, 0, 1, 1], [], []>} : vector<8x16xf32>, vector<16x256xf32>, vector<8x256xf32> -> vector<8x256xf32>
    %66 = vector.broadcast %47 : vector<8x1xf32> to vector<8x256xf32>
    %67 = arith.addf %65, %66 : vector<8x256xf32>
    %cst_45 = arith.constant 0.000000e+00 : f32
    %68 = vector.broadcast %cst_45 : f32 to vector<8x256xf32>
    %69 = arith.cmpf ogt, %67, %68 : vector<8x256xf32>
    %cst_46 = arith.constant 2.000000e-01 : f32
    %70 = vector.broadcast %cst_46 : f32 to vector<8x256xf32>
    %71 = arith.mulf %70, %67 : vector<8x256xf32>
    %72 = arith.select %69, %67, %71 : vector<8x256xi1>, vector<8x256xf32>
    %c0_47 = arith.constant 0 : index
    %c1_48 = arith.constant 1 : index
    %c0_49 = arith.constant 0 : index
    %c0_50 = arith.constant 0 : index
    %73 = vector.load %arg5[%c0_47, %c1_48, %c0_49, %c0_50] : memref<1x4x8x256xf32, #tpu.memory_space<vmem>>, vector<1x1x8x256xf32>
    %74 = vector.shape_cast %73 : vector<1x1x8x256xf32> to vector<8x256xf32>
    %75 = vector.shape_cast %72 : vector<8x256xf32> to vector<1x1x8x256xf32>
    tpu.vector_store %arg5[%c0_47, %c1_48, %c0_49, %c0_50], %75 {strides = array<i32>} : memref<1x4x8x256xf32, #tpu.memory_space<vmem>>, vector<1x1x8x256xf32>,
    %76 = tpu.concatenate %21, %26, %36, %41 in 0 : vector<4x256xf32>, vector<4x256xf32>, vector<4x256xf32>, vector<4x256xf32> -> vector<16x256xf32>
    %c2_51 = arith.constant 2 : index
    %c0_52 = arith.constant 0 : index
    %c0_53 = arith.constant 0 : index
    %77 = vector.load %arg3[%c2_51, %c0_52, %c0_53] : memref<4x8x16xf32, #tpu.memory_space<vmem>>, vector<1x8x16xf32>
    %78 = vector.shape_cast %77 : vector<1x8x16xf32> to vector<8x16xf32>
    %cst_54 = arith.constant dense<0.000000e+00> : vector<8x256xf32>
    %79 = tpu.matmul %78, %76, %cst_54 {dimension_numbers = #tpu.dot_dimension_numbers<[1], [0], [0], [1], [0, 0, 1, 1], [], []>} : vector<8x16xf32>, vector<16x256xf32>, vector<8x256xf32> -> vector<8x256xf32>
    %80 = vector.broadcast %47 : vector<8x1xf32> to vector<8x256xf32>
    %81 = arith.addf %79, %80 : vector<8x256xf32>
    %cst_55 = arith.constant 0.000000e+00 : f32
    %82 = vector.broadcast %cst_55 : f32 to vector<8x256xf32>
    %83 = arith.cmpf ogt, %81, %82 : vector<8x256xf32>
    %cst_56 = arith.constant 2.000000e-01 : f32
    %84 = vector.broadcast %cst_56 : f32 to vector<8x256xf32>
    %85 = arith.mulf %84, %81 : vector<8x256xf32>
    %86 = arith.select %83, %81, %85 : vector<8x256xi1>, vector<8x256xf32>
    %c0_57 = arith.constant 0 : index
    %c2_58 = arith.constant 2 : index
    %c0_59 = arith.constant 0 : index
    %c0_60 = arith.constant 0 : index
    %87 = vector.load %arg5[%c0_57, %c2_58, %c0_59, %c0_60] : memref<1x4x8x256xf32, #tpu.memory_space<vmem>>, vector<1x1x8x256xf32>
    %88 = vector.shape_cast %87 : vector<1x1x8x256xf32> to vector<8x256xf32>
    %89 = vector.shape_cast %86 : vector<8x256xf32> to vector<1x1x8x256xf32>
    tpu.vector_store %arg5[%c0_57, %c2_58, %c0_59, %c0_60], %89 {strides = array<i32>} : memref<1x4x8x256xf32, #tpu.memory_space<vmem>>, vector<1x1x8x256xf32>,
    %90 = tpu.concatenate %26, %31, %41, %46 in 0 : vector<4x256xf32>, vector<4x256xf32>, vector<4x256xf32>, vector<4x256xf32> -> vector<16x256xf32>
    %c3 = arith.constant 3 : index
    %c0_61 = arith.constant 0 : index
    %c0_62 = arith.constant 0 : index
    %91 = vector.load %arg3[%c3, %c0_61, %c0_62] : memref<4x8x16xf32, #tpu.memory_space<vmem>>, vector<1x8x16xf32>
    %92 = vector.shape_cast %91 : vector<1x8x16xf32> to vector<8x16xf32>
    %cst_63 = arith.constant dense<0.000000e+00> : vector<8x256xf32>
    %93 = tpu.matmul %92, %90, %cst_63 {dimension_numbers = #tpu.dot_dimension_numbers<[1], [0], [0], [1], [0, 0, 1, 1], [], []>} : vector<8x16xf32>, vector<16x256xf32>, vector<8x256xf32> -> vector<8x256xf32>
    %94 = vector.broadcast %47 : vector<8x1xf32> to vector<8x256xf32>
    %95 = arith.addf %93, %94 : vector<8x256xf32>
    %cst_64 = arith.constant 0.000000e+00 : f32
    %96 = vector.broadcast %cst_64 : f32 to vector<8x256xf32>
    %97 = arith.cmpf ogt, %95, %96 : vector<8x256xf32>
    %cst_65 = arith.constant 2.000000e-01 : f32
    %98 = vector.broadcast %cst_65 : f32 to vector<8x256xf32>
    %99 = arith.mulf %98, %95 : vector<8x256xf32>
    %100 = arith.select %97, %95, %99 : vector<8x256xi1>, vector<8x256xf32>
    %c0_66 = arith.constant 0 : index
    %c3_67 = arith.constant 3 : index
    %c0_68 = arith.constant 0 : index
    %c0_69 = arith.constant 0 : index
    %101 = vector.load %arg5[%c0_66, %c3_67, %c0_68, %c0_69] : memref<1x4x8x256xf32, #tpu.memory_space<vmem>>, vector<1x1x8x256xf32>
    %102 = vector.shape_cast %101 : vector<1x1x8x256xf32> to vector<8x256xf32>
    %103 = vector.shape_cast %100 : vector<8x256xf32> to vector<1x1x8x256xf32>
    tpu.vector_store %arg5[%c0_66, %c3_67, %c0_68, %c0_69], %103 {strides = array<i32>} : memref<1x4x8x256xf32, #tpu.memory_space<vmem>>, vector<1x1x8x256xf32>,
    return
  }
  func.func @transform_0(%arg0: i32, %arg1: i32) -> (i32, i32, i32, i32) {
    %c0_i32 = arith.constant 0 : i32
    %c0_i32_0 = arith.constant 0 : i32
    %c0_i32_1 = arith.constant 0 : i32
    %c0_i32_2 = arith.constant 0 : i32
    return %arg0, %c0_i32, %c0_i32_0, %c0_i32_1 : i32, i32, i32, i32
  }
  func.func @transform_1(%arg0: i32, %arg1: i32) -> (i32, i32, i32) {
    %c0_i32 = arith.constant 0 : i32
    %c0_i32_0 = arith.constant 0 : i32
    %c0_i32_1 = arith.constant 0 : i32
    %c0_i32_2 = arith.constant 0 : i32
    return %c0_i32, %c0_i32_0, %c0_i32_1 : i32, i32, i32
  }
  func.func @transform_2(%arg0: i32, %arg1: i32) -> (i32, i32) {
    %c0_i32 = arith.constant 0 : i32
    %c0_i32_0 = arith.constant 0 : i32
    %c0_i32_1 = arith.constant 0 : i32
    return %c0_i32, %c0_i32_0 : i32, i32
  }
  func.func @transform_3(%arg0: i32, %arg1: i32) -> (i32, i32, i32, i32) {
    %c0_i32 = arith.constant 0 : i32
    %c0_i32_0 = arith.constant 0 : i32
    %c0_i32_1 = arith.constant 0 : i32
    return %arg0, %c0_i32, %c0_i32_0, %arg1 : i32, i32, i32, i32
  }
}

</mosaic_0001>

<llo_original>
// kernel: up_block.1
$region0: #{up_block.1}
  #allocation0 [shape = 'u32[]', space=smem, size = 0x4, offset = 0x4, fixed_abs, tag = 'smem constant byte address 0x4 - core index']
  #allocation1 [shape = 'u32[144,128]{1,0:T(1,128)}', space=vmem, size = 0x12000, scoped, tag = 'internal scratch']
  %s0 = inlined_call_operand.vmem [shape: f32[2,4,18,18], index: 0, kind: input, shape index: {}]
  %s1 = inlined_call_operand.vmem [shape: f32[4,8,16], index: 1, kind: input, shape index: {}]
  %s2 = inlined_call_operand.vmem [shape: f32[8,1], index: 2, kind: input, shape index: {}]
  %s3 = inlined_call_operand.vmem [shape: f32[2,4,8,256], index: 3, kind: output, shape index: {}]
  %s4 = sld [smem:[#allocation0]]
  $region45: #{up_block.1} parent=0
    _
  %s6 = ssub.s32 1, %s4
  %s7 = scalar_select 0, %s6, %s4
  loop: start=0, step=1, limit=4
  $region2: #{up_block.1} parent=0 // loop_pre_header
    _
  $region3: #{up_block.1} parent=0 // loop_header
    %s9 = sphi 0, %s13
    %p10 = scmp.ge.s32.totalorder %s9, 4
    %s16 = sphi 0, %s28
    %s17 = sphi 0, %s24
    %s18 = sphi 0, %s16
    %s19 = sphi 0, %s17
    %s20 = sphi 0, %s18
    %s21 = sphi 0, %s19
    %s31 = sphi 0, %s33
    %s34 = sphi 0, %s31
    %s35 = sphi 0, %s34
    %s51 = sphi 0, %s35
    %s55 = sphi 0, %s55
    %s57 = sphi 0, %s55
    %s58 = sphi 0, %s57
    %s72 = sphi 0, %s58
    %s76 = sphi 0, %s76
    %s78 = sphi 0, %s76
    %s79 = sphi 0, %s78
    %s93 = sphi 0, %s79
    %s101 = sphi 0, %s103
    %s104 = sphi 0, %s101
    %s105 = sphi 0, %s104
    %s121 = sphi 0, %s105
  $region4: #{up_block.1} parent=0 // loop_header_branch
    %12 = sbr.rel (%p10) target = $region8
  $region5: #{up_block.1} parent=0 // loop_body
    %s14 = ssub.s32 %s9, 1
    %s15 = ssub.s32 %s9, 2
    %s22 = sadd.s32 1, %s17
    %p23 = scmp.ge.s32.totalorder %s22, 1
    %s24 = scalar_select %p23, 0, %s22
    %s25 = sadd.s32 1, %s16
    %s26 = scalar_select %p23, %s25, %s16
    %p27 = scmp.ge.s32.totalorder %s26, 2
    %s28 = scalar_select %p27, 0, %s26
    %s29 = ssub.s32 %s16, %s28
    %p30 = scmp.eq.s32.totalorder %s29, 0
    %s32 = sadd.s32 %s31, 1
    %s33 = scalar_select %p30, %s31, %s32
    %p36 = pneg %p30
    %p37 = scmp.eq.s32.totalorder %s9, 1
    %p38 = por %p36, %p37
    %p39 = scmp.ne.s32.totalorder %s31, %s34
    %p40 = scmp.eq.s32.totalorder %s9, 0
    %p41 = por %p39, %p40
    %p42 = scmp.ne.s32.totalorder %s31, %s34
    %p43 = scmp.eq.s32.totalorder %s14, 1
    %p44 = por %p42, %p43
    %p45 = scmp.ne.s32.totalorder %s34, %s35
    %p46 = scmp.eq.s32.totalorder %s14, 0
    %p47 = por %p45, %p46
    %p48 = scmp.ne.s32.totalorder %s34, %s35
    %p49 = scmp.eq.s32.totalorder %s15, 1
    %p50 = por %p48, %p49
    %p52 = scmp.ne.s32.totalorder %s35, %s51
    %p53 = scmp.eq.s32.totalorder %s15, 0
    %p54 = por %p52, %p53
    %s56 = sadd.s32 %s55, 1
    %p59 = scmp.eq.s32.totalorder %s9, 1
    %p60 = scmp.ne.s32.totalorder %s55, %s57
    %p61 = scmp.eq.s32.totalorder %s9, 0
    %p62 = por %p60, %p61
    %p63 = scmp.ne.s32.totalorder %s55, %s57
    %p64 = scmp.eq.s32.totalorder %s14, 1
    %p65 = por %p63, %p64
    %p66 = scmp.ne.s32.totalorder %s57, %s58
    %p67 = scmp.eq.s32.totalorder %s14, 0
    %p68 = por %p66, %p67
    %p69 = scmp.ne.s32.totalorder %s57, %s58
    %p70 = scmp.eq.s32.totalorder %s15, 1
    %p71 = por %p69, %p70
    %p73 = scmp.ne.s32.totalorder %s58, %s72
    %p74 = scmp.eq.s32.totalorder %s15, 0
    %p75 = por %p73, %p74
    %s77 = sadd.s32 %s76, 1
    %p80 = scmp.eq.s32.totalorder %s9, 1
    %p81 = scmp.ne.s32.totalorder %s76, %s78
    %p82 = scmp.eq.s32.totalorder %s9, 0
    %p83 = por %p81, %p82
    %p84 = scmp.ne.s32.totalorder %s76, %s78
    %p85 = scmp.eq.s32.totalorder %s14, 1
    %p86 = por %p84, %p85
    %p87 = scmp.ne.s32.totalorder %s78, %s79
    %p88 = scmp.eq.s32.totalorder %s14, 0
    %p89 = por %p87, %p88
    %p90 = scmp.ne.s32.totalorder %s78, %s79
    %p91 = scmp.eq.s32.totalorder %s15, 1
    %p92 = por %p90, %p91
    %p94 = scmp.ne.s32.totalorder %s79, %s93
    %p95 = scmp.eq.s32.totalorder %s15, 0
    %p96 = por %p94, %p95
    %s97 = ssub.s32 %s16, %s28
    %s98 = ssub.s32 %s17, %s24
    %s99 = sor.u32 %s97, %s98
    %p100 = scmp.eq.s32.totalorder %s99, 0
    %s102 = sadd.s32 %s101, 1
    %s103 = scalar_select %p100, %s101, %s102
    %p106 = pneg %p100
    %p107 = scmp.eq.s32.totalorder %s9, 1
    %p108 = por %p106, %p107
    %p109 = scmp.ne.s32.totalorder %s101, %s104
    %p110 = scmp.eq.s32.totalorder %s9, 0
    %p111 = por %p109, %p110
    %p112 = scmp.ne.s32.totalorder %s101, %s104
    %p113 = scmp.eq.s32.totalorder %s14, 1
    %p114 = por %p112, %p113
    %p115 = scmp.ne.s32.totalorder %s104, %s105
    %p116 = scmp.eq.s32.totalorder %s14, 0
    %p117 = por %p115, %p116
    %p118 = scmp.ne.s32.totalorder %s104, %s105
    %p119 = scmp.eq.s32.totalorder %s15, 1
    %p120 = por %p118, %p119
    %p122 = scmp.ne.s32.totalorder %s105, %s121
    %p123 = scmp.eq.s32.totalorder %s15, 0
    %p124 = por %p122, %p123
    %p125 = scmp.le.s32.totalorder 1, %s9
    %p126 = scmp.lt.s32.totalorder %s9, 3
    %p127 = pnand %p125, %p126
    %p128 = pneg %p127
    // Predicated region
    $region9: #{up_block.1} parent=5 // pred_check
      _
    $region10: #{up_block.1} parent=5 // pred_check_branch
      %130 = sbr.rel (%p127) target = $region12
    $region11: #{up_block.1} parent=5 // pred_region
      %s131 = ssub.s32 %s9, 1
      // Predicated region
      $region13: #{up_block.1} parent=11 // pred_check
        %p132 = pneg %p68
      $region14: #{up_block.1} parent=11 // pred_check_branch
        %134 = sbr.rel (%p132) target = $region16
      $region15: #{up_block.1} parent=11 // pred_region
        _
      $region16: #{up_block.1} parent=11 // pred_fallthru
        _
      // Predicated region
      $region17: #{up_block.1} parent=11 // pred_check
        %p135 = pneg %p89
      $region18: #{up_block.1} parent=11 // pred_check_branch
        %137 = sbr.rel (%p135) target = $region20
      $region19: #{up_block.1} parent=11 // pred_region
        _
      $region20: #{up_block.1} parent=11 // pred_fallthru
        _
    $region12: #{up_block.1} parent=5 // pred_fallthru
      _
    %p138 = scmp.lt.s32.totalorder %s9, 2
    // Predicated region
    $region21: #{up_block.1} parent=5 // pred_check
      %p139 = pneg %p138
    $region22: #{up_block.1} parent=5 // pred_check_branch
      %141 = sbr.rel (%p139) target = $region24
    $region23: #{up_block.1} parent=5 // pred_region
      // Predicated region
      $region25: #{up_block.1} parent=23 // pred_check
        %p142 = pneg %p41
      $region26: #{up_block.1} parent=23 // pred_check_branch
        %144 = sbr.rel (%p142) target = $region28
      $region27: #{up_block.1} parent=23 // pred_region
        %p145 = scmp.lt.s32.totalorder %s16, 1
        %s146 = scalar_select %p145, %s16, 1
        %s147 = smul.addr %s146, 12
        %s148 = smul.addr %s147, 8
        %s149 = scalar_lea.vmem %s0, %s148
      $region28: #{up_block.1} parent=23 // pred_fallthru
        _
    $region24: #{up_block.1} parent=5 // pred_fallthru
      _
    %p150 = scmp.le.s32.totalorder 1, %s9
    %p151 = scmp.lt.s32.totalorder %s9, 3
    %p152 = pnand %p150, %p151
    %p153 = pneg %p152
    // Predicated region
    $region29: #{up_block.1} parent=5 // pred_check
      _
    $region30: #{up_block.1} parent=5 // pred_check_branch
      %155 = sbr.rel (%p152) target = $region32
    $region31: #{up_block.1} parent=5 // pred_region
      %s156 = ssub.s32 %s9, 1
      %p157 = scmp.lt.s32.totalorder %s18, 1
      %s158 = scalar_select %p157, %s18, 1
      %s159 = smul.addr %s158, 12
      %s160 = smul.addr %s159, 8
      %s161 = scalar_lea.vmem %s0, %s160
      %p162 = pneg %p47
      %p163 = pneg %p44
      %p164 = pneg %p68
      %p165 = pneg %p65
      %p166 = pneg %p89
      %p167 = pneg %p86
      %p168 = pneg %p117
      %p169 = pneg %p114
      %s170 = smul.u32 2, %s19
      %p171 = scmp.lt.s32.totalorder %s18, 1
      %s172 = scalar_select %p171, %s18, 1
      %p173 = scmp.lt.s32.totalorder %s170, 1
      %s174 = scalar_select %p173, %s170, 1
      %s175 = smul.addr %s172, 8
      %s176 = sadd.s32 %s174, %s175
      %s177 = smul.addr %s176, 8
      %s178 = scalar_lea.vmem %s3, %s177
      %p179 = scmp.lt.s32.totalorder %s18, 1
      %s180 = scalar_select %p179, %s18, 1
      %s181 = smul.addr %s180, 12
      %s182 = smul.addr %s181, 8
      %s183 = scalar_lea.vmem %s0, %s182
      %s184 = smul.u32 2, %s19
      %p185 = scmp.lt.s32.totalorder %s18, 1
      %s186 = scalar_select %p185, %s18, 1
      %p187 = scmp.lt.s32.totalorder %s184, 1
      %s188 = scalar_select %p187, %s184, 1
      %s189 = smul.addr %s186, 8
      %s190 = sadd.s32 %s188, %s189
      %s191 = smul.addr %s190, 8
      %s192 = scalar_lea.vmem %s3, %s191
      %s193 = smul.u32 2, %s19
      %s194 = smul.u32 %s19, 16
      %s195 = scalar_lea.vmem %s183, %s194
      %v196 = vld [vmem:[%s195] sm:$0xff]
      %v197 = vld [vmem:[%s195 + $0x8] sm:$0xff]
      %v198 = vld [vmem:[%s195 + $0x18] sm:$0xff]
      %v199 = vld [vmem:[%s195 + $0x20] sm:$0xff]
      %v200 = vld [vmem:[%s195 + $0x30] sm:$0xff]
      %v201 = vld [vmem:[%s195 + $0x38] sm:$0xff]
      %v202 = vld [vmem:[%s195 + $0x48] sm:$0xff]
      %v203 = vld [vmem:[%s195 + $0x50] sm:$0xff]
      %v204 = vcombine.low %v196, %v200
      %v205 = vcombine.high %v196, %v200
      %v207 = vunpack.c.l.s4 1983009808
      %v208 = vunpack.c.0.s8 %v207
      %v209 = vlaneseq
      %v210 = vshrl.u32 %v209, 7
      %v211 = vsub.s32 %v208, %v210
      %v212 = vrot.slane %v204, %v211
      %v214 = vunpack.c.l.s4 1983009808
      %v215 = vunpack.c.0.s8 %v214
      %v216 = vlaneseq
      %v217 = vshrl.u32 %v216, 7
      %v218 = vsub.s32 %v215, %v217
      %v219 = vrot.slane %v205, %v218
      %v220 = vcombine.low %v198, %v202
      %v221 = vcombine.high %v198, %v202
      %v223 = vunpack.c.l.s4 1983009808
      %v224 = vunpack.c.0.s8 %v223
      %v225 = vlaneseq
      %v226 = vshrl.u32 %v225, 7
      %v227 = vsub.s32 %v224, %v226
      %v228 = vrot.slane %v220, %v227
      %v230 = vunpack.c.l.s4 1983009808
      %v231 = vunpack.c.0.s8 %v230
      %v232 = vlaneseq
      %v233 = vshrl.u32 %v232, 7
      %v234 = vsub.s32 %v231, %v233
      %v235 = vrot.slane %v221, %v234
      %v236 = vcombine.low %v212, %v228
      %v237 = vcombine.high %v212, %v228
      %v239 = vunpack.c.l.s4 1934713408
      %v240 = vunpack.c.0.s8 %v239
      %v241 = vlaneseq
      %v242 = vshrl.u32 %v241, 7
      %v243 = vsub.s32 %v240, %v242
      %v244 = vrot.slane %v236, %v243
      %v246 = vunpack.c.l.s4 1934713408
      %v247 = vunpack.c.0.s8 %v246
      %v248 = vlaneseq
      %v249 = vshrl.u32 %v248, 7
      %v250 = vsub.s32 %v247, %v249
      %v251 = vrot.slane %v237, %v250
      %v252 = vcombine.low %v219, %v235
      %v253 = vcombine.high %v219, %v235
      %v255 = vunpack.c.l.s4 1934713408
      %v256 = vunpack.c.0.s8 %v255
      %v257 = vlaneseq
      %v258 = vshrl.u32 %v257, 7
      %v259 = vsub.s32 %v256, %v258
      %v260 = vrot.slane %v252, %v259
      %v262 = vunpack.c.l.s4 1934713408
      %v263 = vunpack.c.0.s8 %v262
      %v264 = vlaneseq
      %v265 = vshrl.u32 %v264, 7
      %v266 = vsub.s32 %v263, %v265
      %v267 = vrot.slane %v253, %v266
      %v268 = vcombine.high %v244, 0.0
      %v269 = vcombine.high %v251, 0.0
      %v270 = vcombine.high %v260, 0.0
      %v271 = vcombine.high %v267, 0.0
      %v272 = vcombine.low %v197, %v201
      %v273 = vcombine.high %v197, %v201
      %v275 = vunpack.c.l.s4 1983009808
      %v276 = vunpack.c.0.s8 %v275
      %v277 = vlaneseq
      %v278 = vshrl.u32 %v277, 7
      %v279 = vsub.s32 %v276, %v278
      %v280 = vrot.slane %v272, %v279
      %v282 = vunpack.c.l.s4 1983009808
      %v283 = vunpack.c.0.s8 %v282
      %v284 = vlaneseq
      %v285 = vshrl.u32 %v284, 7
      %v286 = vsub.s32 %v283, %v285
      %v287 = vrot.slane %v273, %v286
      %v288 = vcombine.low %v199, %v203
      %v289 = vcombine.high %v199, %v203
      %v291 = vunpack.c.l.s4 1983009808
      %v292 = vunpack.c.0.s8 %v291
      %v293 = vlaneseq
      %v294 = vshrl.u32 %v293, 7
      %v295 = vsub.s32 %v292, %v294
      %v296 = vrot.slane %v288, %v295
      %v298 = vunpack.c.l.s4 1983009808
      %v299 = vunpack.c.0.s8 %v298
      %v300 = vlaneseq
      %v301 = vshrl.u32 %v300, 7
      %v302 = vsub.s32 %v299, %v301
      %v303 = vrot.slane %v289, %v302
      %v304 = vcombine.low %v280, %v296
      %v305 = vcombine.high %v280, %v296
      %v307 = vunpack.c.l.s4 1934713408
      %v308 = vunpack.c.0.s8 %v307
      %v309 = vlaneseq
      %v310 = vshrl.u32 %v309, 7
      %v311 = vsub.s32 %v308, %v310
      %v312 = vrot.slane %v304, %v311
      %v314 = vunpack.c.l.s4 1934713408
      %v315 = vunpack.c.0.s8 %v314
      %v316 = vlaneseq
      %v317 = vshrl.u32 %v316, 7
      %v318 = vsub.s32 %v315, %v317
      %v319 = vrot.slane %v305, %v318
      %v320 = vcombine.low %v287, %v303
      %v321 = vcombine.high %v287, %v303
      %v323 = vunpack.c.l.s4 1934713408
      %v324 = vunpack.c.0.s8 %v323
      %v325 = vlaneseq
      %v326 = vshrl.u32 %v325, 7
      %v327 = vsub.s32 %v324, %v326
      %v328 = vrot.slane %v320, %v327
      %v330 = vunpack.c.l.s4 1934713408
      %v331 = vunpack.c.0.s8 %v330
      %v332 = vlaneseq
      %v333 = vshrl.u32 %v332, 7
      %v334 = vsub.s32 %v331, %v333
      %v335 = vrot.slane %v321, %v334
      %v336 = vcombine.high %v312, 0.0
      %v337 = vcombine.high %v319, 0.0
      %v338 = vcombine.high %v328, 0.0
      %v339 = vcombine.high %v335, 0.0
      %341 = vrot.lane.b32.xlu0 %v268, 16
      %v342 = vpop.permute.xlu0 %341
      %345 = vrot.lane.b32.xlu0 %v251, 32
      %v346 = vpop.permute.xlu0 %345
      %349 = vrot.lane.b32.xlu0 %v269, 48
      %v350 = vpop.permute.xlu0 %349
      %353 = vrot.lane.b32.xlu0 %v260, 64
      %v354 = vpop.permute.xlu0 %353
      %357 = vrot.lane.b32.xlu0 %v270, 80
      %v358 = vpop.permute.xlu0 %357
      %361 = vrot.lane.b32.xlu0 %v267, 96
      %v362 = vpop.permute.xlu0 %361
      %365 = vrot.lane.b32.xlu0 %v271, 112
      %v366 = vpop.permute.xlu0 %365
      %369 = vrot.lane.b32.xlu0 %v336, 16
      %v370 = vpop.permute.xlu0 %369
      %373 = vrot.lane.b32.xlu0 %v319, 32
      %v374 = vpop.permute.xlu0 %373
      %377 = vrot.lane.b32.xlu0 %v337, 48
      %v378 = vpop.permute.xlu0 %377
      %381 = vrot.lane.b32.xlu0 %v328, 64
      %v382 = vpop.permute.xlu0 %381
      %385 = vrot.lane.b32.xlu0 %v338, 80
      %v386 = vpop.permute.xlu0 %385
      %389 = vrot.lane.b32.xlu0 %v335, 96
      %v390 = vpop.permute.xlu0 %389
      %393 = vrot.lane.b32.xlu0 %v339, 112
      %v394 = vpop.permute.xlu0 %393
      %vm396 = vcmask 130048
      %v397 = vsel %vm396, %v244, %v342
      %vm398 = vcmask 261120
      %v399 = vsel %vm398, %v397, %v346
      %vm400 = vcmask 392192
      %v401 = vsel %vm400, %v399, %v350
      %vm402 = vcmask 523264
      %v403 = vsel %vm402, %v401, %v354
      %vm404 = vcmask 654336
      %v405 = vsel %vm404, %v403, %v358
      %vm406 = vcmask 785408
      %v407 = vsel %vm406, %v405, %v362
      %vm408 = vcmask 916480
      %v409 = vsel %vm408, %v407, %v366
      %v410 = vsel %vm396, %v312, %v370
      %v411 = vsel %vm398, %v410, %v374
      %v412 = vsel %vm400, %v411, %v378
      %v413 = vsel %vm402, %v412, %v382
      %v414 = vsel %vm404, %v413, %v386
      %v415 = vsel %vm406, %v414, %v390
      %v416 = vsel %vm408, %v415, %v394
      %425 = vrot.lane.b32.xlu0 %v196, 127
      %v426 = vpop.permute.xlu0 %425
      %427 = vrot.lane.b32.xlu0 %v197, 127
      %v428 = vpop.permute.xlu0 %427
      %429 = vrot.lane.b32.xlu0 %v198, 127
      %v430 = vpop.permute.xlu0 %429
      %431 = vrot.lane.b32.xlu0 %v199, 127
      %v432 = vpop.permute.xlu0 %431
      %433 = vrot.lane.b32.xlu0 %v200, 127
      %v434 = vpop.permute.xlu0 %433
      %435 = vrot.lane.b32.xlu0 %v201, 127
      %v436 = vpop.permute.xlu0 %435
      %437 = vrot.lane.b32.xlu0 %v202, 127
      %v438 = vpop.permute.xlu0 %437
      %439 = vrot.lane.b32.xlu0 %v203, 127
      %v440 = vpop.permute.xlu0 %439
      %v449 = vcombine.low %v426, %v434
      %v450 = vcombine.high %v426, %v434
      %v452 = vunpack.c.l.s4 1983009808
      %v453 = vunpack.c.0.s8 %v452
      %v454 = vlaneseq
      %v455 = vshrl.u32 %v454, 7
      %v456 = vsub.s32 %v453, %v455
      %v457 = vrot.slane %v449, %v456
      %v459 = vunpack.c.l.s4 1983009808
      %v460 = vunpack.c.0.s8 %v459
      %v461 = vlaneseq
      %v462 = vshrl.u32 %v461, 7
      %v463 = vsub.s32 %v460, %v462
      %v464 = vrot.slane %v450, %v463
      %v465 = vcombine.low %v430, %v438
      %v466 = vcombine.high %v430, %v438
      %v468 = vunpack.c.l.s4 1983009808
      %v469 = vunpack.c.0.s8 %v468
      %v470 = vlaneseq
      %v471 = vshrl.u32 %v470, 7
      %v472 = vsub.s32 %v469, %v471
      %v473 = vrot.slane %v465, %v472
      %v475 = vunpack.c.l.s4 1983009808
      %v476 = vunpack.c.0.s8 %v475
      %v477 = vlaneseq
      %v478 = vshrl.u32 %v477, 7
      %v479 = vsub.s32 %v476, %v478
      %v480 = vrot.slane %v466, %v479
      %v481 = vcombine.low %v457, %v473
      %v482 = vcombine.high %v457, %v473
      %v484 = vunpack.c.l.s4 1934713408
      %v485 = vunpack.c.0.s8 %v484
      %v486 = vlaneseq
      %v487 = vshrl.u32 %v486, 7
      %v488 = vsub.s32 %v485, %v487
      %v489 = vrot.slane %v481, %v488
      %v491 = vunpack.c.l.s4 1934713408
      %v492 = vunpack.c.0.s8 %v491
      %v493 = vlaneseq
      %v494 = vshrl.u32 %v493, 7
      %v495 = vsub.s32 %v492, %v494
      %v496 = vrot.slane %v482, %v495
      %v497 = vcombine.low %v464, %v480
      %v498 = vcombine.high %v464, %v480
      %v500 = vunpack.c.l.s4 1934713408
      %v501 = vunpack.c.0.s8 %v500
      %v502 = vlaneseq
      %v503 = vshrl.u32 %v502, 7
      %v504 = vsub.s32 %v501, %v503
      %v505 = vrot.slane %v497, %v504
      %v507 = vunpack.c.l.s4 1934713408
      %v508 = vunpack.c.0.s8 %v507
      %v509 = vlaneseq
      %v510 = vshrl.u32 %v509, 7
      %v511 = vsub.s32 %v508, %v510
      %v512 = vrot.slane %v498, %v511
      %v513 = vcombine.high %v489, 0.0
      %v514 = vcombine.high %v496, 0.0
      %v515 = vcombine.high %v505, 0.0
      %v516 = vcombine.high %v512, 0.0
      %v517 = vcombine.low %v428, %v436
      %v518 = vcombine.high %v428, %v436
      %v520 = vunpack.c.l.s4 1983009808
      %v521 = vunpack.c.0.s8 %v520
      %v522 = vlaneseq
      %v523 = vshrl.u32 %v522, 7
      %v524 = vsub.s32 %v521, %v523
      %v525 = vrot.slane %v517, %v524
      %v527 = vunpack.c.l.s4 1983009808
      %v528 = vunpack.c.0.s8 %v527
      %v529 = vlaneseq
      %v530 = vshrl.u32 %v529, 7
      %v531 = vsub.s32 %v528, %v530
      %v532 = vrot.slane %v518, %v531
      %v533 = vcombine.low %v432, %v440
      %v534 = vcombine.high %v432, %v440
      %v536 = vunpack.c.l.s4 1983009808
      %v537 = vunpack.c.0.s8 %v536
      %v538 = vlaneseq
      %v539 = vshrl.u32 %v538, 7
      %v540 = vsub.s32 %v537, %v539
      %v541 = vrot.slane %v533, %v540
      %v543 = vunpack.c.l.s4 1983009808
      %v544 = vunpack.c.0.s8 %v543
      %v545 = vlaneseq
      %v546 = vshrl.u32 %v545, 7
      %v547 = vsub.s32 %v544, %v546
      %v548 = vrot.slane %v534, %v547
      %v549 = vcombine.low %v525, %v541
      %v550 = vcombine.high %v525, %v541
      %v552 = vunpack.c.l.s4 1934713408
      %v553 = vunpack.c.0.s8 %v552
      %v554 = vlaneseq
      %v555 = vshrl.u32 %v554, 7
      %v556 = vsub.s32 %v553, %v555
      %v557 = vrot.slane %v549, %v556
      %v559 = vunpack.c.l.s4 1934713408
      %v560 = vunpack.c.0.s8 %v559
      %v561 = vlaneseq
      %v562 = vshrl.u32 %v561, 7
      %v563 = vsub.s32 %v560, %v562
      %v564 = vrot.slane %v550, %v563
      %v565 = vcombine.low %v532, %v548
      %v566 = vcombine.high %v532, %v548
      %v568 = vunpack.c.l.s4 1934713408
      %v569 = vunpack.c.0.s8 %v568
      %v570 = vlaneseq
      %v571 = vshrl.u32 %v570, 7
      %v572 = vsub.s32 %v569, %v571
      %v573 = vrot.slane %v565, %v572
      %v575 = vunpack.c.l.s4 1934713408
      %v576 = vunpack.c.0.s8 %v575
      %v577 = vlaneseq
      %v578 = vshrl.u32 %v577, 7
      %v579 = vsub.s32 %v576, %v578
      %v580 = vrot.slane %v566, %v579
      %v581 = vcombine.high %v557, 0.0
      %v582 = vcombine.high %v564, 0.0
      %v583 = vcombine.high %v573, 0.0
      %v584 = vcombine.high %v580, 0.0
      %586 = vrot.lane.b32.xlu0 %v513, 16
      %v587 = vpop.permute.xlu0 %586
      %590 = vrot.lane.b32.xlu0 %v496, 32
      %v591 = vpop.permute.xlu0 %590
      %594 = vrot.lane.b32.xlu0 %v514, 48
      %v595 = vpop.permute.xlu0 %594
      %598 = vrot.lane.b32.xlu0 %v505, 64
      %v599 = vpop.permute.xlu0 %598
      %602 = vrot.lane.b32.xlu0 %v515, 80
      %v603 = vpop.permute.xlu0 %602
      %606 = vrot.lane.b32.xlu0 %v512, 96
      %v607 = vpop.permute.xlu0 %606
      %610 = vrot.lane.b32.xlu0 %v516, 112
      %v611 = vpop.permute.xlu0 %610
      %614 = vrot.lane.b32.xlu0 %v581, 16
      %v615 = vpop.permute.xlu0 %614
      %618 = vrot.lane.b32.xlu0 %v564, 32
      %v619 = vpop.permute.xlu0 %618
      %622 = vrot.lane.b32.xlu0 %v582, 48
      %v623 = vpop.permute.xlu0 %622
      %626 = vrot.lane.b32.xlu0 %v573, 64
      %v627 = vpop.permute.xlu0 %626
      %630 = vrot.lane.b32.xlu0 %v583, 80
      %v631 = vpop.permute.xlu0 %630
      %634 = vrot.lane.b32.xlu0 %v580, 96
      %v635 = vpop.permute.xlu0 %634
      %638 = vrot.lane.b32.xlu0 %v584, 112
      %v639 = vpop.permute.xlu0 %638
      %v641 = vsel %vm396, %v489, %v587
      %v642 = vsel %vm398, %v641, %v591
      %v643 = vsel %vm400, %v642, %v595
      %v644 = vsel %vm402, %v643, %v599
      %v645 = vsel %vm404, %v644, %v603
      %v646 = vsel %vm406, %v645, %v607
      %v647 = vsel %vm408, %v646, %v611
      %v648 = vsel %vm396, %v557, %v615
      %v649 = vsel %vm398, %v648, %v619
      %v650 = vsel %vm400, %v649, %v623
      %v651 = vsel %vm402, %v650, %v627
      %v652 = vsel %vm404, %v651, %v631
      %v653 = vsel %vm406, %v652, %v635
      %v654 = vsel %vm408, %v653, %v639
      %655 = vrot.lane.b32.xlu0 %v196, 126
      %v656 = vpop.permute.xlu0 %655
      %657 = vrot.lane.b32.xlu0 %v197, 126
      %v658 = vpop.permute.xlu0 %657
      %659 = vrot.lane.b32.xlu0 %v198, 126
      %v660 = vpop.permute.xlu0 %659
      %661 = vrot.lane.b32.xlu0 %v199, 126
      %v662 = vpop.permute.xlu0 %661
      %663 = vrot.lane.b32.xlu0 %v200, 126
      %v664 = vpop.permute.xlu0 %663
      %665 = vrot.lane.b32.xlu0 %v201, 126
      %v666 = vpop.permute.xlu0 %665
      %667 = vrot.lane.b32.xlu0 %v202, 126
      %v668 = vpop.permute.xlu0 %667
      %669 = vrot.lane.b32.xlu0 %v203, 126
      %v670 = vpop.permute.xlu0 %669
      %v679 = vcombine.low %v656, %v664
      %v680 = vcombine.high %v656, %v664
      %v682 = vunpack.c.l.s4 1983009808
      %v683 = vunpack.c.0.s8 %v682
      %v684 = vlaneseq
      %v685 = vshrl.u32 %v684, 7
      %v686 = vsub.s32 %v683, %v685
      %v687 = vrot.slane %v679, %v686
      %v689 = vunpack.c.l.s4 1983009808
      %v690 = vunpack.c.0.s8 %v689
      %v691 = vlaneseq
      %v692 = vshrl.u32 %v691, 7
      %v693 = vsub.s32 %v690, %v692
      %v694 = vrot.slane %v680, %v693
      %v695 = vcombine.low %v660, %v668
      %v696 = vcombine.high %v660, %v668
      %v698 = vunpack.c.l.s4 1983009808
      %v699 = vunpack.c.0.s8 %v698
      %v700 = vlaneseq
      %v701 = vshrl.u32 %v700, 7
      %v702 = vsub.s32 %v699, %v701
      %v703 = vrot.slane %v695, %v702
      %v705 = vunpack.c.l.s4 1983009808
      %v706 = vunpack.c.0.s8 %v705
      %v707 = vlaneseq
      %v708 = vshrl.u32 %v707, 7
      %v709 = vsub.s32 %v706, %v708
      %v710 = vrot.slane %v696, %v709
      %v711 = vcombine.low %v687, %v703
      %v712 = vcombine.high %v687, %v703
      %v714 = vunpack.c.l.s4 1934713408
      %v715 = vunpack.c.0.s8 %v714
      %v716 = vlaneseq
      %v717 = vshrl.u32 %v716, 7
      %v718 = vsub.s32 %v715, %v717
      %v719 = vrot.slane %v711, %v718
      %v721 = vunpack.c.l.s4 1934713408
      %v722 = vunpack.c.0.s8 %v721
      %v723 = vlaneseq
      %v724 = vshrl.u32 %v723, 7
      %v725 = vsub.s32 %v722, %v724
      %v726 = vrot.slane %v712, %v725
      %v727 = vcombine.low %v694, %v710
      %v728 = vcombine.high %v694, %v710
      %v730 = vunpack.c.l.s4 1934713408
      %v731 = vunpack.c.0.s8 %v730
      %v732 = vlaneseq
      %v733 = vshrl.u32 %v732, 7
      %v734 = vsub.s32 %v731, %v733
      %v735 = vrot.slane %v727, %v734
      %v737 = vunpack.c.l.s4 1934713408
      %v738 = vunpack.c.0.s8 %v737
      %v739 = vlaneseq
      %v740 = vshrl.u32 %v739, 7
      %v741 = vsub.s32 %v738, %v740
      %v742 = vrot.slane %v728, %v741
      %v743 = vcombine.high %v719, 0.0
      %v744 = vcombine.high %v726, 0.0
      %v745 = vcombine.high %v735, 0.0
      %v746 = vcombine.high %v742, 0.0
      %v747 = vcombine.low %v658, %v666
      %v748 = vcombine.high %v658, %v666
      %v750 = vunpack.c.l.s4 1983009808
      %v751 = vunpack.c.0.s8 %v750
      %v752 = vlaneseq
      %v753 = vshrl.u32 %v752, 7
      %v754 = vsub.s32 %v751, %v753
      %v755 = vrot.slane %v747, %v754
      %v757 = vunpack.c.l.s4 1983009808
      %v758 = vunpack.c.0.s8 %v757
      %v759 = vlaneseq
      %v760 = vshrl.u32 %v759, 7
      %v761 = vsub.s32 %v758, %v760
      %v762 = vrot.slane %v748, %v761
      %v763 = vcombine.low %v662, %v670
      %v764 = vcombine.high %v662, %v670
      %v766 = vunpack.c.l.s4 1983009808
      %v767 = vunpack.c.0.s8 %v766
      %v768 = vlaneseq
      %v769 = vshrl.u32 %v768, 7
      %v770 = vsub.s32 %v767, %v769
      %v771 = vrot.slane %v763, %v770
      %v773 = vunpack.c.l.s4 1983009808
      %v774 = vunpack.c.0.s8 %v773
      %v775 = vlaneseq
      %v776 = vshrl.u32 %v775, 7
      %v777 = vsub.s32 %v774, %v776
      %v778 = vrot.slane %v764, %v777
      %v779 = vcombine.low %v755, %v771
      %v780 = vcombine.high %v755, %v771
      %v782 = vunpack.c.l.s4 1934713408
      %v783 = vunpack.c.0.s8 %v782
      %v784 = vlaneseq
      %v785 = vshrl.u32 %v784, 7
      %v786 = vsub.s32 %v783, %v785
      %v787 = vrot.slane %v779, %v786
      %v789 = vunpack.c.l.s4 1934713408
      %v790 = vunpack.c.0.s8 %v789
      %v791 = vlaneseq
      %v792 = vshrl.u32 %v791, 7
      %v793 = vsub.s32 %v790, %v792
      %v794 = vrot.slane %v780, %v793
      %v795 = vcombine.low %v762, %v778
      %v796 = vcombine.high %v762, %v778
      %v798 = vunpack.c.l.s4 1934713408
      %v799 = vunpack.c.0.s8 %v798
      %v800 = vlaneseq
      %v801 = vshrl.u32 %v800, 7
      %v802 = vsub.s32 %v799, %v801
      %v803 = vrot.slane %v795, %v802
      %v805 = vunpack.c.l.s4 1934713408
      %v806 = vunpack.c.0.s8 %v805
      %v807 = vlaneseq
      %v808 = vshrl.u32 %v807, 7
      %v809 = vsub.s32 %v806, %v808
      %v810 = vrot.slane %v796, %v809
      %v811 = vcombine.high %v787, 0.0
      %v812 = vcombine.high %v794, 0.0
      %v813 = vcombine.high %v803, 0.0
      %v814 = vcombine.high %v810, 0.0
      %816 = vrot.lane.b32.xlu0 %v743, 16
      %v817 = vpop.permute.xlu0 %816
      %820 = vrot.lane.b32.xlu0 %v726, 32
      %v821 = vpop.permute.xlu0 %820
      %824 = vrot.lane.b32.xlu0 %v744, 48
      %v825 = vpop.permute.xlu0 %824
      %828 = vrot.lane.b32.xlu0 %v735, 64
      %v829 = vpop.permute.xlu0 %828
      %832 = vrot.lane.b32.xlu0 %v745, 80
      %v833 = vpop.permute.xlu0 %832
      %836 = vrot.lane.b32.xlu0 %v742, 96
      %v837 = vpop.permute.xlu0 %836
      %840 = vrot.lane.b32.xlu0 %v746, 112
      %v841 = vpop.permute.xlu0 %840
      %844 = vrot.lane.b32.xlu0 %v811, 16
      %v845 = vpop.permute.xlu0 %844
      %848 = vrot.lane.b32.xlu0 %v794, 32
      %v849 = vpop.permute.xlu0 %848
      %852 = vrot.lane.b32.xlu0 %v812, 48
      %v853 = vpop.permute.xlu0 %852
      %856 = vrot.lane.b32.xlu0 %v803, 64
      %v857 = vpop.permute.xlu0 %856
      %860 = vrot.lane.b32.xlu0 %v813, 80
      %v861 = vpop.permute.xlu0 %860
      %864 = vrot.lane.b32.xlu0 %v810, 96
      %v865 = vpop.permute.xlu0 %864
      %868 = vrot.lane.b32.xlu0 %v814, 112
      %v869 = vpop.permute.xlu0 %868
      %v871 = vsel %vm396, %v719, %v817
      %v872 = vsel %vm398, %v871, %v821
      %v873 = vsel %vm400, %v872, %v825
      %v874 = vsel %vm402, %v873, %v829
      %v875 = vsel %vm404, %v874, %v833
      %v876 = vsel %vm406, %v875, %v837
      %v877 = vsel %vm408, %v876, %v841
      %v878 = vsel %vm396, %v787, %v845
      %v879 = vsel %vm398, %v878, %v849
      %v880 = vsel %vm400, %v879, %v853
      %v881 = vsel %vm402, %v880, %v857
      %v882 = vsel %vm404, %v881, %v861
      %v883 = vsel %vm406, %v882, %v865
      %v884 = vsel %vm408, %v883, %v869
      %s885 = sadd.s32 %s194, 1
      %s886 = scalar_lea.vmem %s183, %s885
      %v887 = vld [vmem:[%s886] sm:$0xff]
      %v888 = vld [vmem:[%s886 + $0x8] sm:$0xff]
      %v889 = vld [vmem:[%s886 + $0x18] sm:$0xff]
      %v890 = vld [vmem:[%s886 + $0x20] sm:$0xff]
      %v891 = vld [vmem:[%s886 + $0x30] sm:$0xff]
      %v892 = vld [vmem:[%s886 + $0x38] sm:$0xff]
      %v893 = vld [vmem:[%s886 + $0x48] sm:$0xff]
      %v894 = vld [vmem:[%s886 + $0x50] sm:$0xff]
      %v895 = vcombine.low %v887, %v891
      %v896 = vcombine.high %v887, %v891
      %v898 = vunpack.c.l.s4 1983009808
      %v899 = vunpack.c.0.s8 %v898
      %v900 = vlaneseq
      %v901 = vshrl.u32 %v900, 7
      %v902 = vsub.s32 %v899, %v901
      %v903 = vrot.slane %v895, %v902
      %v905 = vunpack.c.l.s4 1983009808
      %v906 = vunpack.c.0.s8 %v905
      %v907 = vlaneseq
      %v908 = vshrl.u32 %v907, 7
      %v909 = vsub.s32 %v906, %v908
      %v910 = vrot.slane %v896, %v909
      %v911 = vcombine.low %v889, %v893
      %v912 = vcombine.high %v889, %v893
      %v914 = vunpack.c.l.s4 1983009808
      %v915 = vunpack.c.0.s8 %v914
      %v916 = vlaneseq
      %v917 = vshrl.u32 %v916, 7
      %v918 = vsub.s32 %v915, %v917
      %v919 = vrot.slane %v911, %v918
      %v921 = vunpack.c.l.s4 1983009808
      %v922 = vunpack.c.0.s8 %v921
      %v923 = vlaneseq
      %v924 = vshrl.u32 %v923, 7
      %v925 = vsub.s32 %v922, %v924
      %v926 = vrot.slane %v912, %v925
      %v927 = vcombine.low %v903, %v919
      %v928 = vcombine.high %v903, %v919
      %v930 = vunpack.c.l.s4 1934713408
      %v931 = vunpack.c.0.s8 %v930
      %v932 = vlaneseq
      %v933 = vshrl.u32 %v932, 7
      %v934 = vsub.s32 %v931, %v933
      %v935 = vrot.slane %v927, %v934
      %v937 = vunpack.c.l.s4 1934713408
      %v938 = vunpack.c.0.s8 %v937
      %v939 = vlaneseq
      %v940 = vshrl.u32 %v939, 7
      %v941 = vsub.s32 %v938, %v940
      %v942 = vrot.slane %v928, %v941
      %v943 = vcombine.low %v910, %v926
      %v944 = vcombine.high %v910, %v926
      %v946 = vunpack.c.l.s4 1934713408
      %v947 = vunpack.c.0.s8 %v946
      %v948 = vlaneseq
      %v949 = vshrl.u32 %v948, 7
      %v950 = vsub.s32 %v947, %v949
      %v951 = vrot.slane %v943, %v950
      %v953 = vunpack.c.l.s4 1934713408
      %v954 = vunpack.c.0.s8 %v953
      %v955 = vlaneseq
      %v956 = vshrl.u32 %v955, 7
      %v957 = vsub.s32 %v954, %v956
      %v958 = vrot.slane %v944, %v957
      %v959 = vcombine.high %v935, 0.0
      %v960 = vcombine.high %v942, 0.0
      %v961 = vcombine.high %v951, 0.0
      %v962 = vcombine.high %v958, 0.0
      %v963 = vcombine.low %v888, %v892
      %v964 = vcombine.high %v888, %v892
      %v966 = vunpack.c.l.s4 1983009808
      %v967 = vunpack.c.0.s8 %v966
      %v968 = vlaneseq
      %v969 = vshrl.u32 %v968, 7
      %v970 = vsub.s32 %v967, %v969
      %v971 = vrot.slane %v963, %v970
      %v973 = vunpack.c.l.s4 1983009808
      %v974 = vunpack.c.0.s8 %v973
      %v975 = vlaneseq
      %v976 = vshrl.u32 %v975, 7
      %v977 = vsub.s32 %v974, %v976
      %v978 = vrot.slane %v964, %v977
      %v979 = vcombine.low %v890, %v894
      %v980 = vcombine.high %v890, %v894
      %v982 = vunpack.c.l.s4 1983009808
      %v983 = vunpack.c.0.s8 %v982
      %v984 = vlaneseq
      %v985 = vshrl.u32 %v984, 7
      %v986 = vsub.s32 %v983, %v985
      %v987 = vrot.slane %v979, %v986
      %v989 = vunpack.c.l.s4 1983009808
      %v990 = vunpack.c.0.s8 %v989
      %v991 = vlaneseq
      %v992 = vshrl.u32 %v991, 7
      %v993 = vsub.s32 %v990, %v992
      %v994 = vrot.slane %v980, %v993
      %v995 = vcombine.low %v971, %v987
      %v996 = vcombine.high %v971, %v987
      %v998 = vunpack.c.l.s4 1934713408
      %v999 = vunpack.c.0.s8 %v998
      %v1000 = vlaneseq
      %v1001 = vshrl.u32 %v1000, 7
      %v1002 = vsub.s32 %v999, %v1001
      %v1003 = vrot.slane %v995, %v1002
      %v1005 = vunpack.c.l.s4 1934713408
      %v1006 = vunpack.c.0.s8 %v1005
      %v1007 = vlaneseq
      %v1008 = vshrl.u32 %v1007, 7
      %v1009 = vsub.s32 %v1006, %v1008
      %v1010 = vrot.slane %v996, %v1009
      %v1011 = vcombine.low %v978, %v994
      %v1012 = vcombine.high %v978, %v994
      %v1014 = vunpack.c.l.s4 1934713408
      %v1015 = vunpack.c.0.s8 %v1014
      %v1016 = vlaneseq
      %v1017 = vshrl.u32 %v1016, 7
      %v1018 = vsub.s32 %v1015, %v1017
      %v1019 = vrot.slane %v1011, %v1018
      %v1021 = vunpack.c.l.s4 1934713408
      %v1022 = vunpack.c.0.s8 %v1021
      %v1023 = vlaneseq
      %v1024 = vshrl.u32 %v1023, 7
      %v1025 = vsub.s32 %v1022, %v1024
      %v1026 = vrot.slane %v1012, %v1025
      %v1027 = vcombine.high %v1003, 0.0
      %v1028 = vcombine.high %v1010, 0.0
      %v1029 = vcombine.high %v1019, 0.0
      %v1030 = vcombine.high %v1026, 0.0
      %1032 = vrot.lane.b32.xlu0 %v959, 16
      %v1033 = vpop.permute.xlu0 %1032
      %1036 = vrot.lane.b32.xlu0 %v942, 32
      %v1037 = vpop.permute.xlu0 %1036
      %1040 = vrot.lane.b32.xlu0 %v960, 48
      %v1041 = vpop.permute.xlu0 %1040
      %1044 = vrot.lane.b32.xlu0 %v951, 64
      %v1045 = vpop.permute.xlu0 %1044
      %1048 = vrot.lane.b32.xlu0 %v961, 80
      %v1049 = vpop.permute.xlu0 %1048
      %1052 = vrot.lane.b32.xlu0 %v958, 96
      %v1053 = vpop.permute.xlu0 %1052
      %1056 = vrot.lane.b32.xlu0 %v962, 112
      %v1057 = vpop.permute.xlu0 %1056
      %1060 = vrot.lane.b32.xlu0 %v1027, 16
      %v1061 = vpop.permute.xlu0 %1060
      %1064 = vrot.lane.b32.xlu0 %v1010, 32
      %v1065 = vpop.permute.xlu0 %1064
      %1068 = vrot.lane.b32.xlu0 %v1028, 48
      %v1069 = vpop.permute.xlu0 %1068
      %1072 = vrot.lane.b32.xlu0 %v1019, 64
      %v1073 = vpop.permute.xlu0 %1072
      %1076 = vrot.lane.b32.xlu0 %v1029, 80
      %v1077 = vpop.permute.xlu0 %1076
      %1080 = vrot.lane.b32.xlu0 %v1026, 96
      %v1081 = vpop.permute.xlu0 %1080
      %1084 = vrot.lane.b32.xlu0 %v1030, 112
      %v1085 = vpop.permute.xlu0 %1084
      %v1087 = vsel %vm396, %v935, %v1033
      %v1088 = vsel %vm398, %v1087, %v1037
      %v1089 = vsel %vm400, %v1088, %v1041
      %v1090 = vsel %vm402, %v1089, %v1045
      %v1091 = vsel %vm404, %v1090, %v1049
      %v1092 = vsel %vm406, %v1091, %v1053
      %v1093 = vsel %vm408, %v1092, %v1057
      %v1094 = vsel %vm396, %v1003, %v1061
      %v1095 = vsel %vm398, %v1094, %v1065
      %v1096 = vsel %vm400, %v1095, %v1069
      %v1097 = vsel %vm402, %v1096, %v1073
      %v1098 = vsel %vm404, %v1097, %v1077
      %v1099 = vsel %vm406, %v1098, %v1081
      %v1100 = vsel %vm408, %v1099, %v1085
      %1109 = vrot.lane.b32.xlu0 %v887, 127
      %v1110 = vpop.permute.xlu0 %1109
      %1111 = vrot.lane.b32.xlu0 %v888, 127
      %v1112 = vpop.permute.xlu0 %1111
      %1113 = vrot.lane.b32.xlu0 %v889, 127
      %v1114 = vpop.permute.xlu0 %1113
      %1115 = vrot.lane.b32.xlu0 %v890, 127
      %v1116 = vpop.permute.xlu0 %1115
      %1117 = vrot.lane.b32.xlu0 %v891, 127
      %v1118 = vpop.permute.xlu0 %1117
      %1119 = vrot.lane.b32.xlu0 %v892, 127
      %v1120 = vpop.permute.xlu0 %1119
      %1121 = vrot.lane.b32.xlu0 %v893, 127
      %v1122 = vpop.permute.xlu0 %1121
      %1123 = vrot.lane.b32.xlu0 %v894, 127
      %v1124 = vpop.permute.xlu0 %1123
      %v1133 = vcombine.low %v1110, %v1118
      %v1134 = vcombine.high %v1110, %v1118
      %v1136 = vunpack.c.l.s4 1983009808
      %v1137 = vunpack.c.0.s8 %v1136
      %v1138 = vlaneseq
      %v1139 = vshrl.u32 %v1138, 7
      %v1140 = vsub.s32 %v1137, %v1139
      %v1141 = vrot.slane %v1133, %v1140
      %v1143 = vunpack.c.l.s4 1983009808
      %v1144 = vunpack.c.0.s8 %v1143
      %v1145 = vlaneseq
      %v1146 = vshrl.u32 %v1145, 7
      %v1147 = vsub.s32 %v1144, %v1146
      %v1148 = vrot.slane %v1134, %v1147
      %v1149 = vcombine.low %v1114, %v1122
      %v1150 = vcombine.high %v1114, %v1122
      %v1152 = vunpack.c.l.s4 1983009808
      %v1153 = vunpack.c.0.s8 %v1152
      %v1154 = vlaneseq
      %v1155 = vshrl.u32 %v1154, 7
      %v1156 = vsub.s32 %v1153, %v1155
      %v1157 = vrot.slane %v1149, %v1156
      %v1159 = vunpack.c.l.s4 1983009808
      %v1160 = vunpack.c.0.s8 %v1159
      %v1161 = vlaneseq
      %v1162 = vshrl.u32 %v1161, 7
      %v1163 = vsub.s32 %v1160, %v1162
      %v1164 = vrot.slane %v1150, %v1163
      %v1165 = vcombine.low %v1141, %v1157
      %v1166 = vcombine.high %v1141, %v1157
      %v1168 = vunpack.c.l.s4 1934713408
      %v1169 = vunpack.c.0.s8 %v1168
      %v1170 = vlaneseq
      %v1171 = vshrl.u32 %v1170, 7
      %v1172 = vsub.s32 %v1169, %v1171
      %v1173 = vrot.slane %v1165, %v1172
      %v1175 = vunpack.c.l.s4 1934713408
      %v1176 = vunpack.c.0.s8 %v1175
      %v1177 = vlaneseq
      %v1178 = vshrl.u32 %v1177, 7
      %v1179 = vsub.s32 %v1176, %v1178
      %v1180 = vrot.slane %v1166, %v1179
      %v1181 = vcombine.low %v1148, %v1164
      %v1182 = vcombine.high %v1148, %v1164
      %v1184 = vunpack.c.l.s4 1934713408
      %v1185 = vunpack.c.0.s8 %v1184
      %v1186 = vlaneseq
      %v1187 = vshrl.u32 %v1186, 7
      %v1188 = vsub.s32 %v1185, %v1187
      %v1189 = vrot.slane %v1181, %v1188
      %v1191 = vunpack.c.l.s4 1934713408
      %v1192 = vunpack.c.0.s8 %v1191
      %v1193 = vlaneseq
      %v1194 = vshrl.u32 %v1193, 7
      %v1195 = vsub.s32 %v1192, %v1194
      %v1196 = vrot.slane %v1182, %v1195
      %v1197 = vcombine.high %v1173, 0.0
      %v1198 = vcombine.high %v1180, 0.0
      %v1199 = vcombine.high %v1189, 0.0
      %v1200 = vcombine.high %v1196, 0.0
      %v1201 = vcombine.low %v1112, %v1120
      %v1202 = vcombine.high %v1112, %v1120
      %v1204 = vunpack.c.l.s4 1983009808
      %v1205 = vunpack.c.0.s8 %v1204
      %v1206 = vlaneseq
      %v1207 = vshrl.u32 %v1206, 7
      %v1208 = vsub.s32 %v1205, %v1207
      %v1209 = vrot.slane %v1201, %v1208
      %v1211 = vunpack.c.l.s4 1983009808
      %v1212 = vunpack.c.0.s8 %v1211
      %v1213 = vlaneseq
      %v1214 = vshrl.u32 %v1213, 7
      %v1215 = vsub.s32 %v1212, %v1214
      %v1216 = vrot.slane %v1202, %v1215
      %v1217 = vcombine.low %v1116, %v1124
      %v1218 = vcombine.high %v1116, %v1124
      %v1220 = vunpack.c.l.s4 1983009808
      %v1221 = vunpack.c.0.s8 %v1220
      %v1222 = vlaneseq
      %v1223 = vshrl.u32 %v1222, 7
      %v1224 = vsub.s32 %v1221, %v1223
      %v1225 = vrot.slane %v1217, %v1224
      %v1227 = vunpack.c.l.s4 1983009808
      %v1228 = vunpack.c.0.s8 %v1227
      %v1229 = vlaneseq
      %v1230 = vshrl.u32 %v1229, 7
      %v1231 = vsub.s32 %v1228, %v1230
      %v1232 = vrot.slane %v1218, %v1231
      %v1233 = vcombine.low %v1209, %v1225
      %v1234 = vcombine.high %v1209, %v1225
      %v1236 = vunpack.c.l.s4 1934713408
      %v1237 = vunpack.c.0.s8 %v1236
      %v1238 = vlaneseq
      %v1239 = vshrl.u32 %v1238, 7
      %v1240 = vsub.s32 %v1237, %v1239
      %v1241 = vrot.slane %v1233, %v1240
      %v1243 = vunpack.c.l.s4 1934713408
      %v1244 = vunpack.c.0.s8 %v1243
      %v1245 = vlaneseq
      %v1246 = vshrl.u32 %v1245, 7
      %v1247 = vsub.s32 %v1244, %v1246
      %v1248 = vrot.slane %v1234, %v1247
      %v1249 = vcombine.low %v1216, %v1232
      %v1250 = vcombine.high %v1216, %v1232
      %v1252 = vunpack.c.l.s4 1934713408
      %v1253 = vunpack.c.0.s8 %v1252
      %v1254 = vlaneseq
      %v1255 = vshrl.u32 %v1254, 7
      %v1256 = vsub.s32 %v1253, %v1255
      %v1257 = vrot.slane %v1249, %v1256
      %v1259 = vunpack.c.l.s4 1934713408
      %v1260 = vunpack.c.0.s8 %v1259
      %v1261 = vlaneseq
      %v1262 = vshrl.u32 %v1261, 7
      %v1263 = vsub.s32 %v1260, %v1262
      %v1264 = vrot.slane %v1250, %v1263
      %v1265 = vcombine.high %v1241, 0.0
      %v1266 = vcombine.high %v1248, 0.0
      %v1267 = vcombine.high %v1257, 0.0
      %v1268 = vcombine.high %v1264, 0.0
      %1270 = vrot.lane.b32.xlu0 %v1197, 16
      %v1271 = vpop.permute.xlu0 %1270
      %1274 = vrot.lane.b32.xlu0 %v1180, 32
      %v1275 = vpop.permute.xlu0 %1274
      %1278 = vrot.lane.b32.xlu0 %v1198, 48
      %v1279 = vpop.permute.xlu0 %1278
      %1282 = vrot.lane.b32.xlu0 %v1189, 64
      %v1283 = vpop.permute.xlu0 %1282
      %1286 = vrot.lane.b32.xlu0 %v1199, 80
      %v1287 = vpop.permute.xlu0 %1286
      %1290 = vrot.lane.b32.xlu0 %v1196, 96
      %v1291 = vpop.permute.xlu0 %1290
      %1294 = vrot.lane.b32.xlu0 %v1200, 112
      %v1295 = vpop.permute.xlu0 %1294
      %1298 = vrot.lane.b32.xlu0 %v1265, 16
      %v1299 = vpop.permute.xlu0 %1298
      %1302 = vrot.lane.b32.xlu0 %v1248, 32
      %v1303 = vpop.permute.xlu0 %1302
      %1306 = vrot.lane.b32.xlu0 %v1266, 48
      %v1307 = vpop.permute.xlu0 %1306
      %1310 = vrot.lane.b32.xlu0 %v1257, 64
      %v1311 = vpop.permute.xlu0 %1310
      %1314 = vrot.lane.b32.xlu0 %v1267, 80
      %v1315 = vpop.permute.xlu0 %1314
      %1318 = vrot.lane.b32.xlu0 %v1264, 96
      %v1319 = vpop.permute.xlu0 %1318
      %1322 = vrot.lane.b32.xlu0 %v1268, 112
      %v1323 = vpop.permute.xlu0 %1322
      %v1325 = vsel %vm396, %v1173, %v1271
      %v1326 = vsel %vm398, %v1325, %v1275
      %v1327 = vsel %vm400, %v1326, %v1279
      %v1328 = vsel %vm402, %v1327, %v1283
      %v1329 = vsel %vm404, %v1328, %v1287
      %v1330 = vsel %vm406, %v1329, %v1291
      %v1331 = vsel %vm408, %v1330, %v1295
      %v1332 = vsel %vm396, %v1241, %v1299
      %v1333 = vsel %vm398, %v1332, %v1303
      %v1334 = vsel %vm400, %v1333, %v1307
      %v1335 = vsel %vm402, %v1334, %v1311
      %v1336 = vsel %vm404, %v1335, %v1315
      %v1337 = vsel %vm406, %v1336, %v1319
      %v1338 = vsel %vm408, %v1337, %v1323
      %1339 = vrot.lane.b32.xlu0 %v887, 126
      %v1340 = vpop.permute.xlu0 %1339
      %1341 = vrot.lane.b32.xlu0 %v888, 126
      %v1342 = vpop.permute.xlu0 %1341
      %1343 = vrot.lane.b32.xlu0 %v889, 126
      %v1344 = vpop.permute.xlu0 %1343
      %1345 = vrot.lane.b32.xlu0 %v890, 126
      %v1346 = vpop.permute.xlu0 %1345
      %1347 = vrot.lane.b32.xlu0 %v891, 126
      %v1348 = vpop.permute.xlu0 %1347
      %1349 = vrot.lane.b32.xlu0 %v892, 126
      %v1350 = vpop.permute.xlu0 %1349
      %1351 = vrot.lane.b32.xlu0 %v893, 126
      %v1352 = vpop.permute.xlu0 %1351
      %1353 = vrot.lane.b32.xlu0 %v894, 126
      %v1354 = vpop.permute.xlu0 %1353
      %v1363 = vcombine.low %v1340, %v1348
      %v1364 = vcombine.high %v1340, %v1348
      %v1366 = vunpack.c.l.s4 1983009808
      %v1367 = vunpack.c.0.s8 %v1366
      %v1368 = vlaneseq
      %v1369 = vshrl.u32 %v1368, 7
      %v1370 = vsub.s32 %v1367, %v1369
      %v1371 = vrot.slane %v1363, %v1370
      %v1373 = vunpack.c.l.s4 1983009808
      %v1374 = vunpack.c.0.s8 %v1373
      %v1375 = vlaneseq
      %v1376 = vshrl.u32 %v1375, 7
      %v1377 = vsub.s32 %v1374, %v1376
      %v1378 = vrot.slane %v1364, %v1377
      %v1379 = vcombine.low %v1344, %v1352
      %v1380 = vcombine.high %v1344, %v1352
      %v1382 = vunpack.c.l.s4 1983009808
      %v1383 = vunpack.c.0.s8 %v1382
      %v1384 = vlaneseq
      %v1385 = vshrl.u32 %v1384, 7
      %v1386 = vsub.s32 %v1383, %v1385
      %v1387 = vrot.slane %v1379, %v1386
      %v1389 = vunpack.c.l.s4 1983009808
      %v1390 = vunpack.c.0.s8 %v1389
      %v1391 = vlaneseq
      %v1392 = vshrl.u32 %v1391, 7
      %v1393 = vsub.s32 %v1390, %v1392
      %v1394 = vrot.slane %v1380, %v1393
      %v1395 = vcombine.low %v1371, %v1387
      %v1396 = vcombine.high %v1371, %v1387
      %v1398 = vunpack.c.l.s4 1934713408
      %v1399 = vunpack.c.0.s8 %v1398
      %v1400 = vlaneseq
      %v1401 = vshrl.u32 %v1400, 7
      %v1402 = vsub.s32 %v1399, %v1401
      %v1403 = vrot.slane %v1395, %v1402
      %v1405 = vunpack.c.l.s4 1934713408
      %v1406 = vunpack.c.0.s8 %v1405
      %v1407 = vlaneseq
      %v1408 = vshrl.u32 %v1407, 7
      %v1409 = vsub.s32 %v1406, %v1408
      %v1410 = vrot.slane %v1396, %v1409
      %v1411 = vcombine.low %v1378, %v1394
      %v1412 = vcombine.high %v1378, %v1394
      %v1414 = vunpack.c.l.s4 1934713408
      %v1415 = vunpack.c.0.s8 %v1414
      %v1416 = vlaneseq
      %v1417 = vshrl.u32 %v1416, 7
      %v1418 = vsub.s32 %v1415, %v1417
      %v1419 = vrot.slane %v1411, %v1418
      %v1421 = vunpack.c.l.s4 1934713408
      %v1422 = vunpack.c.0.s8 %v1421
      %v1423 = vlaneseq
      %v1424 = vshrl.u32 %v1423, 7
      %v1425 = vsub.s32 %v1422, %v1424
      %v1426 = vrot.slane %v1412, %v1425
      %v1427 = vcombine.high %v1403, 0.0
      %v1428 = vcombine.high %v1410, 0.0
      %v1429 = vcombine.high %v1419, 0.0
      %v1430 = vcombine.high %v1426, 0.0
      %v1431 = vcombine.low %v1342, %v1350
      %v1432 = vcombine.high %v1342, %v1350
      %v1434 = vunpack.c.l.s4 1983009808
      %v1435 = vunpack.c.0.s8 %v1434
      %v1436 = vlaneseq
      %v1437 = vshrl.u32 %v1436, 7
      %v1438 = vsub.s32 %v1435, %v1437
      %v1439 = vrot.slane %v1431, %v1438
      %v1441 = vunpack.c.l.s4 1983009808
      %v1442 = vunpack.c.0.s8 %v1441
      %v1443 = vlaneseq
      %v1444 = vshrl.u32 %v1443, 7
      %v1445 = vsub.s32 %v1442, %v1444
      %v1446 = vrot.slane %v1432, %v1445
      %v1447 = vcombine.low %v1346, %v1354
      %v1448 = vcombine.high %v1346, %v1354
      %v1450 = vunpack.c.l.s4 1983009808
      %v1451 = vunpack.c.0.s8 %v1450
      %v1452 = vlaneseq
      %v1453 = vshrl.u32 %v1452, 7
      %v1454 = vsub.s32 %v1451, %v1453
      %v1455 = vrot.slane %v1447, %v1454
      %v1457 = vunpack.c.l.s4 1983009808
      %v1458 = vunpack.c.0.s8 %v1457
      %v1459 = vlaneseq
      %v1460 = vshrl.u32 %v1459, 7
      %v1461 = vsub.s32 %v1458, %v1460
      %v1462 = vrot.slane %v1448, %v1461
      %v1463 = vcombine.low %v1439, %v1455
      %v1464 = vcombine.high %v1439, %v1455
      %v1466 = vunpack.c.l.s4 1934713408
      %v1467 = vunpack.c.0.s8 %v1466
      %v1468 = vlaneseq
      %v1469 = vshrl.u32 %v1468, 7
      %v1470 = vsub.s32 %v1467, %v1469
      %v1471 = vrot.slane %v1463, %v1470
      %v1473 = vunpack.c.l.s4 1934713408
      %v1474 = vunpack.c.0.s8 %v1473
      %v1475 = vlaneseq
      %v1476 = vshrl.u32 %v1475, 7
      %v1477 = vsub.s32 %v1474, %v1476
      %v1478 = vrot.slane %v1464, %v1477
      %v1479 = vcombine.low %v1446, %v1462
      %v1480 = vcombine.high %v1446, %v1462
      %v1482 = vunpack.c.l.s4 1934713408
      %v1483 = vunpack.c.0.s8 %v1482
      %v1484 = vlaneseq
      %v1485 = vshrl.u32 %v1484, 7
      %v1486 = vsub.s32 %v1483, %v1485
      %v1487 = vrot.slane %v1479, %v1486
      %v1489 = vunpack.c.l.s4 1934713408
      %v1490 = vunpack.c.0.s8 %v1489
      %v1491 = vlaneseq
      %v1492 = vshrl.u32 %v1491, 7
      %v1493 = vsub.s32 %v1490, %v1492
      %v1494 = vrot.slane %v1480, %v1493
      %v1495 = vcombine.high %v1471, 0.0
      %v1496 = vcombine.high %v1478, 0.0
      %v1497 = vcombine.high %v1487, 0.0
      %v1498 = vcombine.high %v1494, 0.0
      %1500 = vrot.lane.b32.xlu0 %v1427, 16
      %v1501 = vpop.permute.xlu0 %1500
      %1504 = vrot.lane.b32.xlu0 %v1410, 32
      %v1505 = vpop.permute.xlu0 %1504
      %1508 = vrot.lane.b32.xlu0 %v1428, 48
      %v1509 = vpop.permute.xlu0 %1508
      %1512 = vrot.lane.b32.xlu0 %v1419, 64
      %v1513 = vpop.permute.xlu0 %1512
      %1516 = vrot.lane.b32.xlu0 %v1429, 80
      %v1517 = vpop.permute.xlu0 %1516
      %1520 = vrot.lane.b32.xlu0 %v1426, 96
      %v1521 = vpop.permute.xlu0 %1520
      %1524 = vrot.lane.b32.xlu0 %v1430, 112
      %v1525 = vpop.permute.xlu0 %1524
      %1528 = vrot.lane.b32.xlu0 %v1495, 16
      %v1529 = vpop.permute.xlu0 %1528
      %1532 = vrot.lane.b32.xlu0 %v1478, 32
      %v1533 = vpop.permute.xlu0 %1532
      %1536 = vrot.lane.b32.xlu0 %v1496, 48
      %v1537 = vpop.permute.xlu0 %1536
      %1540 = vrot.lane.b32.xlu0 %v1487, 64
      %v1541 = vpop.permute.xlu0 %1540
      %1544 = vrot.lane.b32.xlu0 %v1497, 80
      %v1545 = vpop.permute.xlu0 %1544
      %1548 = vrot.lane.b32.xlu0 %v1494, 96
      %v1549 = vpop.permute.xlu0 %1548
      %1552 = vrot.lane.b32.xlu0 %v1498, 112
      %v1553 = vpop.permute.xlu0 %1552
      %v1555 = vsel %vm396, %v1403, %v1501
      %v1556 = vsel %vm398, %v1555, %v1505
      %v1557 = vsel %vm400, %v1556, %v1509
      %v1558 = vsel %vm402, %v1557, %v1513
      %v1559 = vsel %vm404, %v1558, %v1517
      %v1560 = vsel %vm406, %v1559, %v1521
      %v1561 = vsel %vm408, %v1560, %v1525
      %v1562 = vsel %vm396, %v1471, %v1529
      %v1563 = vsel %vm398, %v1562, %v1533
      %v1564 = vsel %vm400, %v1563, %v1537
      %v1565 = vsel %vm402, %v1564, %v1541
      %v1566 = vsel %vm404, %v1565, %v1545
      %v1567 = vsel %vm406, %v1566, %v1549
      %v1568 = vsel %vm408, %v1567, %v1553
      %s1569 = sadd.s32 %s194, 2
      %s1570 = scalar_lea.vmem %s183, %s1569
      %v1571 = vld [vmem:[%s1570] sm:$0xff]
      %v1572 = vld [vmem:[%s1570 + $0x8] sm:$0xff]
      %v1573 = vld [vmem:[%s1570 + $0x18] sm:$0xff]
      %v1574 = vld [vmem:[%s1570 + $0x20] sm:$0xff]
      %v1575 = vld [vmem:[%s1570 + $0x30] sm:$0xff]
      %v1576 = vld [vmem:[%s1570 + $0x38] sm:$0xff]
      %v1577 = vld [vmem:[%s1570 + $0x48] sm:$0xff]
      %v1578 = vld [vmem:[%s1570 + $0x50] sm:$0xff]
      %v1579 = vcombine.low %v1571, %v1575
      %v1580 = vcombine.high %v1571, %v1575
      %v1582 = vunpack.c.l.s4 1983009808
      %v1583 = vunpack.c.0.s8 %v1582
      %v1584 = vlaneseq
      %v1585 = vshrl.u32 %v1584, 7
      %v1586 = vsub.s32 %v1583, %v1585
      %v1587 = vrot.slane %v1579, %v1586
      %v1589 = vunpack.c.l.s4 1983009808
      %v1590 = vunpack.c.0.s8 %v1589
      %v1591 = vlaneseq
      %v1592 = vshrl.u32 %v1591, 7
      %v1593 = vsub.s32 %v1590, %v1592
      %v1594 = vrot.slane %v1580, %v1593
      %v1595 = vcombine.low %v1573, %v1577
      %v1596 = vcombine.high %v1573, %v1577
      %v1598 = vunpack.c.l.s4 1983009808
      %v1599 = vunpack.c.0.s8 %v1598
      %v1600 = vlaneseq
      %v1601 = vshrl.u32 %v1600, 7
      %v1602 = vsub.s32 %v1599, %v1601
      %v1603 = vrot.slane %v1595, %v1602
      %v1605 = vunpack.c.l.s4 1983009808
      %v1606 = vunpack.c.0.s8 %v1605
      %v1607 = vlaneseq
      %v1608 = vshrl.u32 %v1607, 7
      %v1609 = vsub.s32 %v1606, %v1608
      %v1610 = vrot.slane %v1596, %v1609
      %v1611 = vcombine.low %v1587, %v1603
      %v1612 = vcombine.high %v1587, %v1603
      %v1614 = vunpack.c.l.s4 1934713408
      %v1615 = vunpack.c.0.s8 %v1614
      %v1616 = vlaneseq
      %v1617 = vshrl.u32 %v1616, 7
      %v1618 = vsub.s32 %v1615, %v1617
      %v1619 = vrot.slane %v1611, %v1618
      %v1621 = vunpack.c.l.s4 1934713408
      %v1622 = vunpack.c.0.s8 %v1621
      %v1623 = vlaneseq
      %v1624 = vshrl.u32 %v1623, 7
      %v1625 = vsub.s32 %v1622, %v1624
      %v1626 = vrot.slane %v1612, %v1625
      %v1627 = vcombine.low %v1594, %v1610
      %v1628 = vcombine.high %v1594, %v1610
      %v1630 = vunpack.c.l.s4 1934713408
      %v1631 = vunpack.c.0.s8 %v1630
      %v1632 = vlaneseq
      %v1633 = vshrl.u32 %v1632, 7
      %v1634 = vsub.s32 %v1631, %v1633
      %v1635 = vrot.slane %v1627, %v1634
      %v1637 = vunpack.c.l.s4 1934713408
      %v1638 = vunpack.c.0.s8 %v1637
      %v1639 = vlaneseq
      %v1640 = vshrl.u32 %v1639, 7
      %v1641 = vsub.s32 %v1638, %v1640
      %v1642 = vrot.slane %v1628, %v1641
      %v1643 = vcombine.high %v1619, 0.0
      %v1644 = vcombine.high %v1626, 0.0
      %v1645 = vcombine.high %v1635, 0.0
      %v1646 = vcombine.high %v1642, 0.0
      %v1647 = vcombine.low %v1572, %v1576
      %v1648 = vcombine.high %v1572, %v1576
      %v1650 = vunpack.c.l.s4 1983009808
      %v1651 = vunpack.c.0.s8 %v1650
      %v1652 = vlaneseq
      %v1653 = vshrl.u32 %v1652, 7
      %v1654 = vsub.s32 %v1651, %v1653
      %v1655 = vrot.slane %v1647, %v1654
      %v1657 = vunpack.c.l.s4 1983009808
      %v1658 = vunpack.c.0.s8 %v1657
      %v1659 = vlaneseq
      %v1660 = vshrl.u32 %v1659, 7
      %v1661 = vsub.s32 %v1658, %v1660
      %v1662 = vrot.slane %v1648, %v1661
      %v1663 = vcombine.low %v1574, %v1578
      %v1664 = vcombine.high %v1574, %v1578
      %v1666 = vunpack.c.l.s4 1983009808
      %v1667 = vunpack.c.0.s8 %v1666
      %v1668 = vlaneseq
      %v1669 = vshrl.u32 %v1668, 7
      %v1670 = vsub.s32 %v1667, %v1669
      %v1671 = vrot.slane %v1663, %v1670
      %v1673 = vunpack.c.l.s4 1983009808
      %v1674 = vunpack.c.0.s8 %v1673
      %v1675 = vlaneseq
      %v1676 = vshrl.u32 %v1675, 7
      %v1677 = vsub.s32 %v1674, %v1676
      %v1678 = vrot.slane %v1664, %v1677
      %v1679 = vcombine.low %v1655, %v1671
      %v1680 = vcombine.high %v1655, %v1671
      %v1682 = vunpack.c.l.s4 1934713408
      %v1683 = vunpack.c.0.s8 %v1682
      %v1684 = vlaneseq
      %v1685 = vshrl.u32 %v1684, 7
      %v1686 = vsub.s32 %v1683, %v1685
      %v1687 = vrot.slane %v1679, %v1686
      %v1689 = vunpack.c.l.s4 1934713408
      %v1690 = vunpack.c.0.s8 %v1689
      %v1691 = vlaneseq
      %v1692 = vshrl.u32 %v1691, 7
      %v1693 = vsub.s32 %v1690, %v1692
      %v1694 = vrot.slane %v1680, %v1693
      %v1695 = vcombine.low %v1662, %v1678
      %v1696 = vcombine.high %v1662, %v1678
      %v1698 = vunpack.c.l.s4 1934713408
      %v1699 = vunpack.c.0.s8 %v1698
      %v1700 = vlaneseq
      %v1701 = vshrl.u32 %v1700, 7
      %v1702 = vsub.s32 %v1699, %v1701
      %v1703 = vrot.slane %v1695, %v1702
      %v1705 = vunpack.c.l.s4 1934713408
      %v1706 = vunpack.c.0.s8 %v1705
      %v1707 = vlaneseq
      %v1708 = vshrl.u32 %v1707, 7
      %v1709 = vsub.s32 %v1706, %v1708
      %v1710 = vrot.slane %v1696, %v1709
      %v1711 = vcombine.high %v1687, 0.0
      %v1712 = vcombine.high %v1694, 0.0
      %v1713 = vcombine.high %v1703, 0.0
      %v1714 = vcombine.high %v1710, 0.0
      %1716 = vrot.lane.b32.xlu0 %v1643, 16
      %v1717 = vpop.permute.xlu0 %1716
      %1720 = vrot.lane.b32.xlu0 %v1626, 32
      %v1721 = vpop.permute.xlu0 %1720
      %1724 = vrot.lane.b32.xlu0 %v1644, 48
      %v1725 = vpop.permute.xlu0 %1724
      %1728 = vrot.lane.b32.xlu0 %v1635, 64
      %v1729 = vpop.permute.xlu0 %1728
      %1732 = vrot.lane.b32.xlu0 %v1645, 80
      %v1733 = vpop.permute.xlu0 %1732
      %1736 = vrot.lane.b32.xlu0 %v1642, 96
      %v1737 = vpop.permute.xlu0 %1736
      %1740 = vrot.lane.b32.xlu0 %v1646, 112
      %v1741 = vpop.permute.xlu0 %1740
      %1744 = vrot.lane.b32.xlu0 %v1711, 16
      %v1745 = vpop.permute.xlu0 %1744
      %1748 = vrot.lane.b32.xlu0 %v1694, 32
      %v1749 = vpop.permute.xlu0 %1748
      %1752 = vrot.lane.b32.xlu0 %v1712, 48
      %v1753 = vpop.permute.xlu0 %1752
      %1756 = vrot.lane.b32.xlu0 %v1703, 64
      %v1757 = vpop.permute.xlu0 %1756
      %1760 = vrot.lane.b32.xlu0 %v1713, 80
      %v1761 = vpop.permute.xlu0 %1760
      %1764 = vrot.lane.b32.xlu0 %v1710, 96
      %v1765 = vpop.permute.xlu0 %1764
      %1768 = vrot.lane.b32.xlu0 %v1714, 112
      %v1769 = vpop.permute.xlu0 %1768
      %v1771 = vsel %vm396, %v1619, %v1717
      %v1772 = vsel %vm398, %v1771, %v1721
      %v1773 = vsel %vm400, %v1772, %v1725
      %v1774 = vsel %vm402, %v1773, %v1729
      %v1775 = vsel %vm404, %v1774, %v1733
      %v1776 = vsel %vm406, %v1775, %v1737
      %v1777 = vsel %vm408, %v1776, %v1741
      %v1778 = vsel %vm396, %v1687, %v1745
      %v1779 = vsel %vm398, %v1778, %v1749
      %v1780 = vsel %vm400, %v1779, %v1753
      %v1781 = vsel %vm402, %v1780, %v1757
      %v1782 = vsel %vm404, %v1781, %v1761
      %v1783 = vsel %vm406, %v1782, %v1765
      %v1784 = vsel %vm408, %v1783, %v1769
      %1793 = vrot.lane.b32.xlu0 %v1571, 127
      %v1794 = vpop.permute.xlu0 %1793
      %1795 = vrot.lane.b32.xlu0 %v1572, 127
      %v1796 = vpop.permute.xlu0 %1795
      %1797 = vrot.lane.b32.xlu0 %v1573, 127
      %v1798 = vpop.permute.xlu0 %1797
      %1799 = vrot.lane.b32.xlu0 %v1574, 127
      %v1800 = vpop.permute.xlu0 %1799
      %1801 = vrot.lane.b32.xlu0 %v1575, 127
      %v1802 = vpop.permute.xlu0 %1801
      %1803 = vrot.lane.b32.xlu0 %v1576, 127
      %v1804 = vpop.permute.xlu0 %1803
      %1805 = vrot.lane.b32.xlu0 %v1577, 127
      %v1806 = vpop.permute.xlu0 %1805
      %1807 = vrot.lane.b32.xlu0 %v1578, 127
      %v1808 = vpop.permute.xlu0 %1807
      %v1817 = vcombine.low %v1794, %v1802
      %v1818 = vcombine.high %v1794, %v1802
      %v1820 = vunpack.c.l.s4 1983009808
      %v1821 = vunpack.c.0.s8 %v1820
      %v1822 = vlaneseq
      %v1823 = vshrl.u32 %v1822, 7
      %v1824 = vsub.s32 %v1821, %v1823
      %v1825 = vrot.slane %v1817, %v1824
      %v1827 = vunpack.c.l.s4 1983009808
      %v1828 = vunpack.c.0.s8 %v1827
      %v1829 = vlaneseq
      %v1830 = vshrl.u32 %v1829, 7
      %v1831 = vsub.s32 %v1828, %v1830
      %v1832 = vrot.slane %v1818, %v1831
      %v1833 = vcombine.low %v1798, %v1806
      %v1834 = vcombine.high %v1798, %v1806
      %v1836 = vunpack.c.l.s4 1983009808
      %v1837 = vunpack.c.0.s8 %v1836
      %v1838 = vlaneseq
      %v1839 = vshrl.u32 %v1838, 7
      %v1840 = vsub.s32 %v1837, %v1839
      %v1841 = vrot.slane %v1833, %v1840
      %v1843 = vunpack.c.l.s4 1983009808
      %v1844 = vunpack.c.0.s8 %v1843
      %v1845 = vlaneseq
      %v1846 = vshrl.u32 %v1845, 7
      %v1847 = vsub.s32 %v1844, %v1846
      %v1848 = vrot.slane %v1834, %v1847
      %v1849 = vcombine.low %v1825, %v1841
      %v1850 = vcombine.high %v1825, %v1841
      %v1852 = vunpack.c.l.s4 1934713408
      %v1853 = vunpack.c.0.s8 %v1852
      %v1854 = vlaneseq
      %v1855 = vshrl.u32 %v1854, 7
      %v1856 = vsub.s32 %v1853, %v1855
      %v1857 = vrot.slane %v1849, %v1856
      %v1859 = vunpack.c.l.s4 1934713408
      %v1860 = vunpack.c.0.s8 %v1859
      %v1861 = vlaneseq
      %v1862 = vshrl.u32 %v1861, 7
      %v1863 = vsub.s32 %v1860, %v1862
      %v1864 = vrot.slane %v1850, %v1863
      %v1865 = vcombine.low %v1832, %v1848
      %v1866 = vcombine.high %v1832, %v1848
      %v1868 = vunpack.c.l.s4 1934713408
      %v1869 = vunpack.c.0.s8 %v1868
      %v1870 = vlaneseq
      %v1871 = vshrl.u32 %v1870, 7
      %v1872 = vsub.s32 %v1869, %v1871
      %v1873 = vrot.slane %v1865, %v1872
      %v1875 = vunpack.c.l.s4 1934713408
      %v1876 = vunpack.c.0.s8 %v1875
      %v1877 = vlaneseq
      %v1878 = vshrl.u32 %v1877, 7
      %v1879 = vsub.s32 %v1876, %v1878
      %v1880 = vrot.slane %v1866, %v1879
      %v1881 = vcombine.high %v1857, 0.0
      %v1882 = vcombine.high %v1864, 0.0
      %v1883 = vcombine.high %v1873, 0.0
      %v1884 = vcombine.high %v1880, 0.0
      %v1885 = vcombine.low %v1796, %v1804
      %v1886 = vcombine.high %v1796, %v1804
      %v1888 = vunpack.c.l.s4 1983009808
      %v1889 = vunpack.c.0.s8 %v1888
      %v1890 = vlaneseq
      %v1891 = vshrl.u32 %v1890, 7
      %v1892 = vsub.s32 %v1889, %v1891
      %v1893 = vrot.slane %v1885, %v1892
      %v1895 = vunpack.c.l.s4 1983009808
      %v1896 = vunpack.c.0.s8 %v1895
      %v1897 = vlaneseq
      %v1898 = vshrl.u32 %v1897, 7
      %v1899 = vsub.s32 %v1896, %v1898
      %v1900 = vrot.slane %v1886, %v1899
      %v1901 = vcombine.low %v1800, %v1808
      %v1902 = vcombine.high %v1800, %v1808
      %v1904 = vunpack.c.l.s4 1983009808
      %v1905 = vunpack.c.0.s8 %v1904
      %v1906 = vlaneseq
      %v1907 = vshrl.u32 %v1906, 7
      %v1908 = vsub.s32 %v1905, %v1907
      %v1909 = vrot.slane %v1901, %v1908
      %v1911 = vunpack.c.l.s4 1983009808
      %v1912 = vunpack.c.0.s8 %v1911
      %v1913 = vlaneseq
      %v1914 = vshrl.u32 %v1913, 7
      %v1915 = vsub.s32 %v1912, %v1914
      %v1916 = vrot.slane %v1902, %v1915
      %v1917 = vcombine.low %v1893, %v1909
      %v1918 = vcombine.high %v1893, %v1909
      %v1920 = vunpack.c.l.s4 1934713408
      %v1921 = vunpack.c.0.s8 %v1920
      %v1922 = vlaneseq
      %v1923 = vshrl.u32 %v1922, 7
      %v1924 = vsub.s32 %v1921, %v1923
      %v1925 = vrot.slane %v1917, %v1924
      %v1927 = vunpack.c.l.s4 1934713408
      %v1928 = vunpack.c.0.s8 %v1927
      %v1929 = vlaneseq
      %v1930 = vshrl.u32 %v1929, 7
      %v1931 = vsub.s32 %v1928, %v1930
      %v1932 = vrot.slane %v1918, %v1931
      %v1933 = vcombine.low %v1900, %v1916
      %v1934 = vcombine.high %v1900, %v1916
      %v1936 = vunpack.c.l.s4 1934713408
      %v1937 = vunpack.c.0.s8 %v1936
      %v1938 = vlaneseq
      %v1939 = vshrl.u32 %v1938, 7
      %v1940 = vsub.s32 %v1937, %v1939
      %v1941 = vrot.slane %v1933, %v1940
      %v1943 = vunpack.c.l.s4 1934713408
      %v1944 = vunpack.c.0.s8 %v1943
      %v1945 = vlaneseq
      %v1946 = vshrl.u32 %v1945, 7
      %v1947 = vsub.s32 %v1944, %v1946
      %v1948 = vrot.slane %v1934, %v1947
      %v1949 = vcombine.high %v1925, 0.0
      %v1950 = vcombine.high %v1932, 0.0
      %v1951 = vcombine.high %v1941, 0.0
      %v1952 = vcombine.high %v1948, 0.0
      %1954 = vrot.lane.b32.xlu0 %v1881, 16
      %v1955 = vpop.permute.xlu0 %1954
      %1958 = vrot.lane.b32.xlu0 %v1864, 32
      %v1959 = vpop.permute.xlu0 %1958
      %1962 = vrot.lane.b32.xlu0 %v1882, 48
      %v1963 = vpop.permute.xlu0 %1962
      %1966 = vrot.lane.b32.xlu0 %v1873, 64
      %v1967 = vpop.permute.xlu0 %1966
      %1970 = vrot.lane.b32.xlu0 %v1883, 80
      %v1971 = vpop.permute.xlu0 %1970
      %1974 = vrot.lane.b32.xlu0 %v1880, 96
      %v1975 = vpop.permute.xlu0 %1974
      %1978 = vrot.lane.b32.xlu0 %v1884, 112
      %v1979 = vpop.permute.xlu0 %1978
      %1982 = vrot.lane.b32.xlu0 %v1949, 16
      %v1983 = vpop.permute.xlu0 %1982
      %1986 = vrot.lane.b32.xlu0 %v1932, 32
      %v1987 = vpop.permute.xlu0 %1986
      %1990 = vrot.lane.b32.xlu0 %v1950, 48
      %v1991 = vpop.permute.xlu0 %1990
      %1994 = vrot.lane.b32.xlu0 %v1941, 64
      %v1995 = vpop.permute.xlu0 %1994
      %1998 = vrot.lane.b32.xlu0 %v1951, 80
      %v1999 = vpop.permute.xlu0 %1998
      %2002 = vrot.lane.b32.xlu0 %v1948, 96
      %v2003 = vpop.permute.xlu0 %2002
      %2006 = vrot.lane.b32.xlu0 %v1952, 112
      %v2007 = vpop.permute.xlu0 %2006
      %v2009 = vsel %vm396, %v1857, %v1955
      %v2010 = vsel %vm398, %v2009, %v1959
      %v2011 = vsel %vm400, %v2010, %v1963
      %v2012 = vsel %vm402, %v2011, %v1967
      %v2013 = vsel %vm404, %v2012, %v1971
      %v2014 = vsel %vm406, %v2013, %v1975
      %v2015 = vsel %vm408, %v2014, %v1979
      %v2016 = vsel %vm396, %v1925, %v1983
      %v2017 = vsel %vm398, %v2016, %v1987
      %v2018 = vsel %vm400, %v2017, %v1991
      %v2019 = vsel %vm402, %v2018, %v1995
      %v2020 = vsel %vm404, %v2019, %v1999
      %v2021 = vsel %vm406, %v2020, %v2003
      %v2022 = vsel %vm408, %v2021, %v2007
      %2023 = vrot.lane.b32.xlu0 %v1571, 126
      %v2024 = vpop.permute.xlu0 %2023
      %2025 = vrot.lane.b32.xlu0 %v1572, 126
      %v2026 = vpop.permute.xlu0 %2025
      %2027 = vrot.lane.b32.xlu0 %v1573, 126
      %v2028 = vpop.permute.xlu0 %2027
      %2029 = vrot.lane.b32.xlu0 %v1574, 126
      %v2030 = vpop.permute.xlu0 %2029
      %2031 = vrot.lane.b32.xlu0 %v1575, 126
      %v2032 = vpop.permute.xlu0 %2031
      %2033 = vrot.lane.b32.xlu0 %v1576, 126
      %v2034 = vpop.permute.xlu0 %2033
      %2035 = vrot.lane.b32.xlu0 %v1577, 126
      %v2036 = vpop.permute.xlu0 %2035
      %2037 = vrot.lane.b32.xlu0 %v1578, 126
      %v2038 = vpop.permute.xlu0 %2037
      %v2047 = vcombine.low %v2024, %v2032
      %v2048 = vcombine.high %v2024, %v2032
      %v2050 = vunpack.c.l.s4 1983009808
      %v2051 = vunpack.c.0.s8 %v2050
      %v2052 = vlaneseq
      %v2053 = vshrl.u32 %v2052, 7
      %v2054 = vsub.s32 %v2051, %v2053
      %v2055 = vrot.slane %v2047, %v2054
      %v2057 = vunpack.c.l.s4 1983009808
      %v2058 = vunpack.c.0.s8 %v2057
      %v2059 = vlaneseq
      %v2060 = vshrl.u32 %v2059, 7
      %v2061 = vsub.s32 %v2058, %v2060
      %v2062 = vrot.slane %v2048, %v2061
      %v2063 = vcombine.low %v2028, %v2036
      %v2064 = vcombine.high %v2028, %v2036
      %v2066 = vunpack.c.l.s4 1983009808
      %v2067 = vunpack.c.0.s8 %v2066
      %v2068 = vlaneseq
      %v2069 = vshrl.u32 %v2068, 7
      %v2070 = vsub.s32 %v2067, %v2069
      %v2071 = vrot.slane %v2063, %v2070
      %v2073 = vunpack.c.l.s4 1983009808
      %v2074 = vunpack.c.0.s8 %v2073
      %v2075 = vlaneseq
      %v2076 = vshrl.u32 %v2075, 7
      %v2077 = vsub.s32 %v2074, %v2076
      %v2078 = vrot.slane %v2064, %v2077
      %v2079 = vcombine.low %v2055, %v2071
      %v2080 = vcombine.high %v2055, %v2071
      %v2082 = vunpack.c.l.s4 1934713408
      %v2083 = vunpack.c.0.s8 %v2082
      %v2084 = vlaneseq
      %v2085 = vshrl.u32 %v2084, 7
      %v2086 = vsub.s32 %v2083, %v2085
      %v2087 = vrot.slane %v2079, %v2086
      %v2089 = vunpack.c.l.s4 1934713408
      %v2090 = vunpack.c.0.s8 %v2089
      %v2091 = vlaneseq
      %v2092 = vshrl.u32 %v2091, 7
      %v2093 = vsub.s32 %v2090, %v2092
      %v2094 = vrot.slane %v2080, %v2093
      %v2095 = vcombine.low %v2062, %v2078
      %v2096 = vcombine.high %v2062, %v2078
      %v2098 = vunpack.c.l.s4 1934713408
      %v2099 = vunpack.c.0.s8 %v2098
      %v2100 = vlaneseq
      %v2101 = vshrl.u32 %v2100, 7
      %v2102 = vsub.s32 %v2099, %v2101
      %v2103 = vrot.slane %v2095, %v2102
      %v2105 = vunpack.c.l.s4 1934713408
      %v2106 = vunpack.c.0.s8 %v2105
      %v2107 = vlaneseq
      %v2108 = vshrl.u32 %v2107, 7
      %v2109 = vsub.s32 %v2106, %v2108
      %v2110 = vrot.slane %v2096, %v2109
      %v2111 = vcombine.high %v2087, 0.0
      %v2112 = vcombine.high %v2094, 0.0
      %v2113 = vcombine.high %v2103, 0.0
      %v2114 = vcombine.high %v2110, 0.0
      %v2115 = vcombine.low %v2026, %v2034
      %v2116 = vcombine.high %v2026, %v2034
      %v2118 = vunpack.c.l.s4 1983009808
      %v2119 = vunpack.c.0.s8 %v2118
      %v2120 = vlaneseq
      %v2121 = vshrl.u32 %v2120, 7
      %v2122 = vsub.s32 %v2119, %v2121
      %v2123 = vrot.slane %v2115, %v2122
      %v2125 = vunpack.c.l.s4 1983009808
      %v2126 = vunpack.c.0.s8 %v2125
      %v2127 = vlaneseq
      %v2128 = vshrl.u32 %v2127, 7
      %v2129 = vsub.s32 %v2126, %v2128
      %v2130 = vrot.slane %v2116, %v2129
      %v2131 = vcombine.low %v2030, %v2038
      %v2132 = vcombine.high %v2030, %v2038
      %v2134 = vunpack.c.l.s4 1983009808
      %v2135 = vunpack.c.0.s8 %v2134
      %v2136 = vlaneseq
      %v2137 = vshrl.u32 %v2136, 7
      %v2138 = vsub.s32 %v2135, %v2137
      %v2139 = vrot.slane %v2131, %v2138
      %v2141 = vunpack.c.l.s4 1983009808
      %v2142 = vunpack.c.0.s8 %v2141
      %v2143 = vlaneseq
      %v2144 = vshrl.u32 %v2143, 7
      %v2145 = vsub.s32 %v2142, %v2144
      %v2146 = vrot.slane %v2132, %v2145
      %v2147 = vcombine.low %v2123, %v2139
      %v2148 = vcombine.high %v2123, %v2139
      %v2150 = vunpack.c.l.s4 1934713408
      %v2151 = vunpack.c.0.s8 %v2150
      %v2152 = vlaneseq
      %v2153 = vshrl.u32 %v2152, 7
      %v2154 = vsub.s32 %v2151, %v2153
      %v2155 = vrot.slane %v2147, %v2154
      %v2157 = vunpack.c.l.s4 1934713408
      %v2158 = vunpack.c.0.s8 %v2157
      %v2159 = vlaneseq
      %v2160 = vshrl.u32 %v2159, 7
      %v2161 = vsub.s32 %v2158, %v2160
      %v2162 = vrot.slane %v2148, %v2161
      %v2163 = vcombine.low %v2130, %v2146
      %v2164 = vcombine.high %v2130, %v2146
      %v2166 = vunpack.c.l.s4 1934713408
      %v2167 = vunpack.c.0.s8 %v2166
      %v2168 = vlaneseq
      %v2169 = vshrl.u32 %v2168, 7
      %v2170 = vsub.s32 %v2167, %v2169
      %v2171 = vrot.slane %v2163, %v2170
      %v2173 = vunpack.c.l.s4 1934713408
      %v2174 = vunpack.c.0.s8 %v2173
      %v2175 = vlaneseq
      %v2176 = vshrl.u32 %v2175, 7
      %v2177 = vsub.s32 %v2174, %v2176
      %v2178 = vrot.slane %v2164, %v2177
      %v2179 = vcombine.high %v2155, 0.0
      %v2180 = vcombine.high %v2162, 0.0
      %v2181 = vcombine.high %v2171, 0.0
      %v2182 = vcombine.high %v2178, 0.0
      %2184 = vrot.lane.b32.xlu0 %v2111, 16
      %v2185 = vpop.permute.xlu0 %2184
      %2188 = vrot.lane.b32.xlu0 %v2094, 32
      %v2189 = vpop.permute.xlu0 %2188
      %2192 = vrot.lane.b32.xlu0 %v2112, 48
      %v2193 = vpop.permute.xlu0 %2192
      %2196 = vrot.lane.b32.xlu0 %v2103, 64
      %v2197 = vpop.permute.xlu0 %2196
      %2200 = vrot.lane.b32.xlu0 %v2113, 80
      %v2201 = vpop.permute.xlu0 %2200
      %2204 = vrot.lane.b32.xlu0 %v2110, 96
      %v2205 = vpop.permute.xlu0 %2204
      %2208 = vrot.lane.b32.xlu0 %v2114, 112
      %v2209 = vpop.permute.xlu0 %2208
      %2212 = vrot.lane.b32.xlu0 %v2179, 16
      %v2213 = vpop.permute.xlu0 %2212
      %2216 = vrot.lane.b32.xlu0 %v2162, 32
      %v2217 = vpop.permute.xlu0 %2216
      %2220 = vrot.lane.b32.xlu0 %v2180, 48
      %v2221 = vpop.permute.xlu0 %2220
      %2224 = vrot.lane.b32.xlu0 %v2171, 64
      %v2225 = vpop.permute.xlu0 %2224
      %2228 = vrot.lane.b32.xlu0 %v2181, 80
      %v2229 = vpop.permute.xlu0 %2228
      %2232 = vrot.lane.b32.xlu0 %v2178, 96
      %v2233 = vpop.permute.xlu0 %2232
      %2236 = vrot.lane.b32.xlu0 %v2182, 112
      %v2237 = vpop.permute.xlu0 %2236
      %v2239 = vsel %vm396, %v2087, %v2185
      %v2240 = vsel %vm398, %v2239, %v2189
      %v2241 = vsel %vm400, %v2240, %v2193
      %v2242 = vsel %vm402, %v2241, %v2197
      %v2243 = vsel %vm404, %v2242, %v2201
      %v2244 = vsel %vm406, %v2243, %v2205
      %v2245 = vsel %vm408, %v2244, %v2209
      %v2246 = vsel %vm396, %v2155, %v2213
      %v2247 = vsel %vm398, %v2246, %v2217
      %v2248 = vsel %vm400, %v2247, %v2221
      %v2249 = vsel %vm402, %v2248, %v2225
      %v2250 = vsel %vm404, %v2249, %v2229
      %v2251 = vsel %vm406, %v2250, %v2233
      %v2252 = vsel %vm408, %v2251, %v2237
      %v2253 = vld [vmem:[%s2] sm:$0xff]
      %v2256 = vrot.slane %v647, 4
      %v2257 = vrot.slane %v654, 4
      %v2262 = vrot.slane %v1331, 4
      %v2263 = vrot.slane %v1338, 4
      %vm2266 = vcmask 1043456
      %v2267 = vsel %vm2266, %v409, %v2256
      %v2268 = vsel %vm2266, %v416, %v2257
      %v2269 = vsel %vm2266, %v1093, %v2262
      %v2270 = vsel %vm2266, %v1100, %v2263
      %v2271 = vld [vmem:[%s1] sm:$0xff]
      %2273 = vset.pattern.permute.xlu0 0
      %2274 = vperm.xlu0 %2273, %v2253
      %v2275 = vpop.permute.xlu0 %2274
      %v2278 = vsel %vm396, %v2271, 0
      %2280 = vmatprep.subr.mxu0 %v2268
      %2281 = vmatpush1.msra.mxu0 %v2267
      %2282 = vmatprep.subr.mxu0 %v2270
      %2283 = vmatpush1.msra.mxu0 %v2269
      %2284 = vmatprep.subr.mxu0 0.0
      %2285 = vmatpush1.msra.mxu0 0.0
      %2286 = vmatprep.subr.mxu0 0.0
      %2287 = vmatpush1.msra.mxu0 0.0
      %2288 = vmatprep.subr.mxu0 0.0
      %2289 = vmatpush1.msra.mxu0 0.0
      %2290 = vmatprep.subr.mxu0 0.0
      %2291 = vmatpush1.msra.mxu0 0.0
      %2292 = vmatprep.subr.mxu0 0.0
      %2293 = vmatpush1.msra.mxu0 0.0
      %2294 = vmatprep.subr.mxu0 0.0
      %2295 = vmatpush1.msra.mxu0 0.0
      %2296 = vmatprep.subr.mxu0 0.0
      %2297 = vmatpush1.msra.mxu0 0.0
      %2298 = vmatprep.subr.mxu0 0.0
      %2299 = vmatpush1.msra.mxu0 0.0
      %2300 = vmatprep.subr.mxu0 0.0
      %2301 = vmatpush1.msra.mxu0 0.0
      %2302 = vmatprep.subr.mxu0 0.0
      %2303 = vmatpush1.msra.mxu0 0.0
      %2304 = vmatprep.subr.mxu0 0.0
      %2305 = vmatpush1.msra.mxu0 0.0
      %2306 = vmatprep.subr.mxu0 0.0
      %2307 = vmatpush1.msra.mxu0 0.0
      %2308 = vmatprep.subr.mxu0 0.0
      %2309 = vmatpush1.msra.mxu0 0.0
      %2310 = vmatprep.subr.mxu0 0.0
      %2311 = vmatpush1.msra.mxu0 0.0
      %2312 = vmatprep.subr.mxu0 0.0
      %2313 = vmatpush1.msra.mxu0 0.0
      %2314 = vmatprep.subr.mxu0 0.0
      %2315 = vmatpush1.msra.mxu0 0.0
      %2316 = vmatprep.subr.mxu0 0.0
      %2317 = vmatpush1.msra.mxu0 0.0
      %2318 = vmatprep.subr.mxu0 0.0
      %2319 = vmatpush1.msra.mxu0 0.0
      %2320 = vmatprep.subr.mxu0 0.0
      %2321 = vmatpush1.msra.mxu0 0.0
      %2322 = vmatprep.subr.mxu0 0.0
      %2323 = vmatpush1.msra.mxu0 0.0
      %2324 = vmatprep.subr.mxu0 0.0
      %2325 = vmatpush1.msra.mxu0 0.0
      %2326 = vmatprep.subr.mxu0 0.0
      %2327 = vmatpush1.msra.mxu0 0.0
      %2328 = vmatprep.subr.mxu0 0.0
      %2329 = vmatpush1.msra.mxu0 0.0
      %2330 = vmatprep.subr.mxu0 0.0
      %2331 = vmatpush1.msra.mxu0 0.0
      %2332 = vmatprep.subr.mxu0 0.0
      %2333 = vmatpush1.msra.mxu0 0.0
      %2334 = vmatprep.subr.mxu0 0.0
      %2335 = vmatpush1.msra.mxu0 0.0
      %2336 = vmatprep.subr.mxu0 0.0
      %2337 = vmatpush1.msra.mxu0 0.0
      %2338 = vmatprep.subr.mxu0 0.0
      %2339 = vmatpush1.msra.mxu0 0.0
      %2340 = vmatprep.subr.mxu0 0.0
      %2341 = vmatpush1.msra.mxu0 0.0
      %2342 = vmatprep.subr.mxu0 0.0
      %2343 = vmatpush1.msra.mxu0 0.0
      %2344 = vmatprep.mubr.f32.mxu0 0.0
      %2345 = vmatmul.mubr.f32.gmra.mrb[0].mxu0 %v2278
      %v2346 = vpop.f32.mrb[0].mxu0
      %v2347 = vadd.f32 %v2275, %v2346
      %v2348 = vpop.f32.mrb[0].mxu0
      %v2349 = vadd.f32 %v2275, %v2348
      %2350 = vdwg.mxu0
      %vm2351 = vcmp.gt.f32.partialorder %v2347, 0.0
      %vm2352 = vcmp.gt.f32.partialorder %v2349, 0.0
      %v2353 = vmul.f32 %v2347, 0.2
      %v2354 = vmul.f32 %v2349, 0.2
      %v2355 = vsel %vm2351, %v2347, %v2353
      %v2356 = vsel %vm2352, %v2349, %v2354
      %2357 = vst [vmem:[%s192] sm:$0xff] %v2355
      %2358 = vst [vmem:[%s192 + $0x8] sm:$0xff] %v2356
      %v2361 = vrot.slane %v877, 4
      %v2362 = vrot.slane %v884, 4
      %v2367 = vrot.slane %v1561, 4
      %v2368 = vrot.slane %v1568, 4
      %v2371 = vsel %vm2266, %v647, %v2361
      %v2372 = vsel %vm2266, %v654, %v2362
      %v2373 = vsel %vm2266, %v1331, %v2367
      %v2374 = vsel %vm2266, %v1338, %v2368
      %s2375 = scalar_lea.vmem %s1, 8
      %v2376 = vld [vmem:[%s2375] sm:$0xff]
      %v2378 = vsel %vm396, %v2376, 0
      %2380 = vmatprep.subr.mxu0 %v2372
      %2381 = vmatpush1.msra.mxu0 %v2371
      %2382 = vmatprep.subr.mxu0 %v2374
      %2383 = vmatpush1.msra.mxu0 %v2373
      %2384 = vmatprep.subr.mxu0 0.0
      %2385 = vmatpush1.msra.mxu0 0.0
      %2386 = vmatprep.subr.mxu0 0.0
      %2387 = vmatpush1.msra.mxu0 0.0
      %2388 = vmatprep.subr.mxu0 0.0
      %2389 = vmatpush1.msra.mxu0 0.0
      %2390 = vmatprep.subr.mxu0 0.0
      %2391 = vmatpush1.msra.mxu0 0.0
      %2392 = vmatprep.subr.mxu0 0.0
      %2393 = vmatpush1.msra.mxu0 0.0
      %2394 = vmatprep.subr.mxu0 0.0
      %2395 = vmatpush1.msra.mxu0 0.0
      %2396 = vmatprep.subr.mxu0 0.0
      %2397 = vmatpush1.msra.mxu0 0.0
      %2398 = vmatprep.subr.mxu0 0.0
      %2399 = vmatpush1.msra.mxu0 0.0
      %2400 = vmatprep.subr.mxu0 0.0
      %2401 = vmatpush1.msra.mxu0 0.0
      %2402 = vmatprep.subr.mxu0 0.0
      %2403 = vmatpush1.msra.mxu0 0.0
      %2404 = vmatprep.subr.mxu0 0.0
      %2405 = vmatpush1.msra.mxu0 0.0
      %2406 = vmatprep.subr.mxu0 0.0
      %2407 = vmatpush1.msra.mxu0 0.0
      %2408 = vmatprep.subr.mxu0 0.0
      %2409 = vmatpush1.msra.mxu0 0.0
      %2410 = vmatprep.subr.mxu0 0.0
      %2411 = vmatpush1.msra.mxu0 0.0
      %2412 = vmatprep.subr.mxu0 0.0
      %2413 = vmatpush1.msra.mxu0 0.0
      %2414 = vmatprep.subr.mxu0 0.0
      %2415 = vmatpush1.msra.mxu0 0.0
      %2416 = vmatprep.subr.mxu0 0.0
      %2417 = vmatpush1.msra.mxu0 0.0
      %2418 = vmatprep.subr.mxu0 0.0
      %2419 = vmatpush1.msra.mxu0 0.0
      %2420 = vmatprep.subr.mxu0 0.0
      %2421 = vmatpush1.msra.mxu0 0.0
      %2422 = vmatprep.subr.mxu0 0.0
      %2423 = vmatpush1.msra.mxu0 0.0
      %2424 = vmatprep.subr.mxu0 0.0
      %2425 = vmatpush1.msra.mxu0 0.0
      %2426 = vmatprep.subr.mxu0 0.0
      %2427 = vmatpush1.msra.mxu0 0.0
      %2428 = vmatprep.subr.mxu0 0.0
      %2429 = vmatpush1.msra.mxu0 0.0
      %2430 = vmatprep.subr.mxu0 0.0
      %2431 = vmatpush1.msra.mxu0 0.0
      %2432 = vmatprep.subr.mxu0 0.0
      %2433 = vmatpush1.msra.mxu0 0.0
      %2434 = vmatprep.subr.mxu0 0.0
      %2435 = vmatpush1.msra.mxu0 0.0
      %2436 = vmatprep.subr.mxu0 0.0
      %2437 = vmatpush1.msra.mxu0 0.0
      %2438 = vmatprep.subr.mxu0 0.0
      %2439 = vmatpush1.msra.mxu0 0.0
      %2440 = vmatprep.subr.mxu0 0.0
      %2441 = vmatpush1.msra.mxu0 0.0
      %2442 = vmatprep.subr.mxu0 0.0
      %2443 = vmatpush1.msra.mxu0 0.0
      %2444 = vmatprep.mubr.f32.mxu0 0.0
      %2445 = vmatmul.mubr.f32.gmra.mrb[0].mxu0 %v2378
      %v2446 = vpop.f32.mrb[0].mxu0
      %v2447 = vadd.f32 %v2275, %v2446
      %v2448 = vpop.f32.mrb[0].mxu0
      %v2449 = vadd.f32 %v2275, %v2448
      %2450 = vdwg.mxu0
      %vm2451 = vcmp.gt.f32.partialorder %v2447, 0.0
      %vm2452 = vcmp.gt.f32.partialorder %v2449, 0.0
      %v2453 = vmul.f32 %v2447, 0.2
      %v2454 = vmul.f32 %v2449, 0.2
      %v2455 = vsel %vm2451, %v2447, %v2453
      %v2456 = vsel %vm2452, %v2449, %v2454
      %s2457 = scalar_lea.vmem %s192, 16
      %2458 = vst [vmem:[%s2457] sm:$0xff] %v2455
      %2459 = vst [vmem:[%s2457 + $0x8] sm:$0xff] %v2456
      %v2462 = vrot.slane %v2015, 4
      %v2463 = vrot.slane %v2022, 4
      %v2466 = vsel %vm2266, %v1777, %v2462
      %v2467 = vsel %vm2266, %v1784, %v2463
      %s2468 = scalar_lea.vmem %s1, 16
      %v2469 = vld [vmem:[%s2468] sm:$0xff]
      %v2471 = vsel %vm396, %v2469, 0
      %2473 = vmatprep.subr.mxu0 %v2270
      %2474 = vmatpush1.msra.mxu0 %v2269
      %2475 = vmatprep.subr.mxu0 %v2467
      %2476 = vmatpush1.msra.mxu0 %v2466
      %2477 = vmatprep.subr.mxu0 0.0
      %2478 = vmatpush1.msra.mxu0 0.0
      %2479 = vmatprep.subr.mxu0 0.0
      %2480 = vmatpush1.msra.mxu0 0.0
      %2481 = vmatprep.subr.mxu0 0.0
      %2482 = vmatpush1.msra.mxu0 0.0
      %2483 = vmatprep.subr.mxu0 0.0
      %2484 = vmatpush1.msra.mxu0 0.0
      %2485 = vmatprep.subr.mxu0 0.0
      %2486 = vmatpush1.msra.mxu0 0.0
      %2487 = vmatprep.subr.mxu0 0.0
      %2488 = vmatpush1.msra.mxu0 0.0
      %2489 = vmatprep.subr.mxu0 0.0
      %2490 = vmatpush1.msra.mxu0 0.0
      %2491 = vmatprep.subr.mxu0 0.0
      %2492 = vmatpush1.msra.mxu0 0.0
      %2493 = vmatprep.subr.mxu0 0.0
      %2494 = vmatpush1.msra.mxu0 0.0
      %2495 = vmatprep.subr.mxu0 0.0
      %2496 = vmatpush1.msra.mxu0 0.0
      %2497 = vmatprep.subr.mxu0 0.0
      %2498 = vmatpush1.msra.mxu0 0.0
      %2499 = vmatprep.subr.mxu0 0.0
      %2500 = vmatpush1.msra.mxu0 0.0
      %2501 = vmatprep.subr.mxu0 0.0
      %2502 = vmatpush1.msra.mxu0 0.0
      %2503 = vmatprep.subr.mxu0 0.0
      %2504 = vmatpush1.msra.mxu0 0.0
      %2505 = vmatprep.subr.mxu0 0.0
      %2506 = vmatpush1.msra.mxu0 0.0
      %2507 = vmatprep.subr.mxu0 0.0
      %2508 = vmatpush1.msra.mxu0 0.0
      %2509 = vmatprep.subr.mxu0 0.0
      %2510 = vmatpush1.msra.mxu0 0.0
      %2511 = vmatprep.subr.mxu0 0.0
      %2512 = vmatpush1.msra.mxu0 0.0
      %2513 = vmatprep.subr.mxu0 0.0
      %2514 = vmatpush1.msra.mxu0 0.0
      %2515 = vmatprep.subr.mxu0 0.0
      %2516 = vmatpush1.msra.mxu0 0.0
      %2517 = vmatprep.subr.mxu0 0.0
      %2518 = vmatpush1.msra.mxu0 0.0
      %2519 = vmatprep.subr.mxu0 0.0
      %2520 = vmatpush1.msra.mxu0 0.0
      %2521 = vmatprep.subr.mxu0 0.0
      %2522 = vmatpush1.msra.mxu0 0.0
      %2523 = vmatprep.subr.mxu0 0.0
      %2524 = vmatpush1.msra.mxu0 0.0
      %2525 = vmatprep.subr.mxu0 0.0
      %2526 = vmatpush1.msra.mxu0 0.0
      %2527 = vmatprep.subr.mxu0 0.0
      %2528 = vmatpush1.msra.mxu0 0.0
      %2529 = vmatprep.subr.mxu0 0.0
      %2530 = vmatpush1.msra.mxu0 0.0
      %2531 = vmatprep.subr.mxu0 0.0
      %2532 = vmatpush1.msra.mxu0 0.0
      %2533 = vmatprep.subr.mxu0 0.0
      %2534 = vmatpush1.msra.mxu0 0.0
      %2535 = vmatprep.subr.mxu0 0.0
      %2536 = vmatpush1.msra.mxu0 0.0
      %2537 = vmatprep.mubr.f32.mxu0 0.0
      %2538 = vmatmul.mubr.f32.gmra.mrb[0].mxu0 %v2471
      %v2539 = vpop.f32.mrb[0].mxu0
      %v2540 = vadd.f32 %v2275, %v2539
      %v2541 = vpop.f32.mrb[0].mxu0
      %v2542 = vadd.f32 %v2275, %v2541
      %2543 = vdwg.mxu0
      %vm2544 = vcmp.gt.f32.partialorder %v2540, 0.0
      %vm2545 = vcmp.gt.f32.partialorder %v2542, 0.0
      %v2546 = vmul.f32 %v2540, 0.2
      %v2547 = vmul.f32 %v2542, 0.2
      %v2548 = vsel %vm2544, %v2540, %v2546
      %v2549 = vsel %vm2545, %v2542, %v2547
      %s2550 = scalar_lea.vmem %s192, 32
      %2551 = vst [vmem:[%s2550] sm:$0xff] %v2548
      %2552 = vst [vmem:[%s2550 + $0x8] sm:$0xff] %v2549
      %v2555 = vrot.slane %v2245, 4
      %v2556 = vrot.slane %v2252, 4
      %v2559 = vsel %vm2266, %v2015, %v2555
      %v2560 = vsel %vm2266, %v2022, %v2556
      %s2561 = scalar_lea.vmem %s1, 24
      %v2562 = vld [vmem:[%s2561] sm:$0xff]
      %v2564 = vsel %vm396, %v2562, 0
      %2566 = vmatprep.subr.mxu0 %v2374
      %2567 = vmatpush1.msra.mxu0 %v2373
      %2568 = vmatprep.subr.mxu0 %v2560
      %2569 = vmatpush1.msra.mxu0 %v2559
      %2570 = vmatprep.subr.mxu0 0.0
      %2571 = vmatpush1.msra.mxu0 0.0
      %2572 = vmatprep.subr.mxu0 0.0
      %2573 = vmatpush1.msra.mxu0 0.0
      %2574 = vmatprep.subr.mxu0 0.0
      %2575 = vmatpush1.msra.mxu0 0.0
      %2576 = vmatprep.subr.mxu0 0.0
      %2577 = vmatpush1.msra.mxu0 0.0
      %2578 = vmatprep.subr.mxu0 0.0
      %2579 = vmatpush1.msra.mxu0 0.0
      %2580 = vmatprep.subr.mxu0 0.0
      %2581 = vmatpush1.msra.mxu0 0.0
      %2582 = vmatprep.subr.mxu0 0.0
      %2583 = vmatpush1.msra.mxu0 0.0
      %2584 = vmatprep.subr.mxu0 0.0
      %2585 = vmatpush1.msra.mxu0 0.0
      %2586 = vmatprep.subr.mxu0 0.0
      %2587 = vmatpush1.msra.mxu0 0.0
      %2588 = vmatprep.subr.mxu0 0.0
      %2589 = vmatpush1.msra.mxu0 0.0
      %2590 = vmatprep.subr.mxu0 0.0
      %2591 = vmatpush1.msra.mxu0 0.0
      %2592 = vmatprep.subr.mxu0 0.0
      %2593 = vmatpush1.msra.mxu0 0.0
      %2594 = vmatprep.subr.mxu0 0.0
      %2595 = vmatpush1.msra.mxu0 0.0
      %2596 = vmatprep.subr.mxu0 0.0
      %2597 = vmatpush1.msra.mxu0 0.0
      %2598 = vmatprep.subr.mxu0 0.0
      %2599 = vmatpush1.msra.mxu0 0.0
      %2600 = vmatprep.subr.mxu0 0.0
      %2601 = vmatpush1.msra.mxu0 0.0
      %2602 = vmatprep.subr.mxu0 0.0
      %2603 = vmatpush1.msra.mxu0 0.0
      %2604 = vmatprep.subr.mxu0 0.0
      %2605 = vmatpush1.msra.mxu0 0.0
      %2606 = vmatprep.subr.mxu0 0.0
      %2607 = vmatpush1.msra.mxu0 0.0
      %2608 = vmatprep.subr.mxu0 0.0
      %2609 = vmatpush1.msra.mxu0 0.0
      %2610 = vmatprep.subr.mxu0 0.0
      %2611 = vmatpush1.msra.mxu0 0.0
      %2612 = vmatprep.subr.mxu0 0.0
      %2613 = vmatpush1.msra.mxu0 0.0
      %2614 = vmatprep.subr.mxu0 0.0
      %2615 = vmatpush1.msra.mxu0 0.0
      %2616 = vmatprep.subr.mxu0 0.0
      %2617 = vmatpush1.msra.mxu0 0.0
      %2618 = vmatprep.subr.mxu0 0.0
      %2619 = vmatpush1.msra.mxu0 0.0
      %2620 = vmatprep.subr.mxu0 0.0
      %2621 = vmatpush1.msra.mxu0 0.0
      %2622 = vmatprep.subr.mxu0 0.0
      %2623 = vmatpush1.msra.mxu0 0.0
      %2624 = vmatprep.subr.mxu0 0.0
      %2625 = vmatpush1.msra.mxu0 0.0
      %2626 = vmatprep.subr.mxu0 0.0
      %2627 = vmatpush1.msra.mxu0 0.0
      %2628 = vmatprep.subr.mxu0 0.0
      %2629 = vmatpush1.msra.mxu0 0.0
      %2630 = vmatprep.mubr.f32.mxu0 0.0
      %2631 = vmatmul.mubr.f32.gmra.mrb[0].mxu0 %v2564
      %v2632 = vpop.f32.mrb[0].mxu0
      %v2633 = vadd.f32 %v2275, %v2632
      %v2634 = vpop.f32.mrb[0].mxu0
      %v2635 = vadd.f32 %v2275, %v2634
      %2636 = vdwg.mxu0
      %vm2637 = vcmp.gt.f32.partialorder %v2633, 0.0
      %vm2638 = vcmp.gt.f32.partialorder %v2635, 0.0
      %v2639 = vmul.f32 %v2633, 0.2
      %v2640 = vmul.f32 %v2635, 0.2
      %v2641 = vsel %vm2637, %v2633, %v2639
      %v2642 = vsel %vm2638, %v2635, %v2640
      %s2643 = scalar_lea.vmem %s192, 48
      %2644 = vst [vmem:[%s2643] sm:$0xff] %v2641
      %2645 = vst [vmem:[%s2643 + $0x8] sm:$0xff] %v2642
      %s2646 = smul.u32 2, %s19
      %p2647 = scmp.lt.s32.totalorder %s18, 1
      %s2648 = scalar_select %p2647, %s18, 1
      %p2649 = scmp.lt.s32.totalorder %s2646, 1
      %s2650 = scalar_select %p2649, %s2646, 1
      %s2651 = smul.addr %s2648, 8
      %s2652 = sadd.s32 %s2650, %s2651
      %s2653 = smul.addr %s2652, 8
      %s2654 = scalar_lea.vmem %s3, %s2653
      // Predicated region
      $region33: #{up_block.1} parent=31 // pred_check
        %p2655 = pneg %p114
      $region34: #{up_block.1} parent=31 // pred_check_branch
        %2657 = sbr.rel (%p2655) target = $region36
      $region35: #{up_block.1} parent=31 // pred_region
        %s2658 = smul.u32 2, %s19
      $region36: #{up_block.1} parent=31 // pred_fallthru
        _
    $region32: #{up_block.1} parent=5 // pred_fallthru
      _
    %p2659 = scmp.le.s32.totalorder 2, %s9
    // Predicated region
    $region37: #{up_block.1} parent=5 // pred_check
      %p2660 = pneg %p2659
    $region38: #{up_block.1} parent=5 // pred_check_branch
      %2662 = sbr.rel (%p2660) target = $region40
    $region39: #{up_block.1} parent=5 // pred_region
      %s2663 = ssub.s32 %s9, 2
      // Predicated region
      $region41: #{up_block.1} parent=39 // pred_check
        %p2664 = pneg %p120
      $region42: #{up_block.1} parent=39 // pred_check_branch
        %2666 = sbr.rel (%p2664) target = $region44
      $region43: #{up_block.1} parent=39 // pred_region
        %s2667 = smul.u32 2, %s21
        %p2668 = scmp.lt.s32.totalorder %s20, 1
        %s2669 = scalar_select %p2668, %s20, 1
        %p2670 = scmp.lt.s32.totalorder %s2667, 1
        %s2671 = scalar_select %p2670, %s2667, 1
        %s2672 = smul.addr %s2669, 8
        %s2673 = sadd.s32 %s2671, %s2672
        %s2674 = smul.addr %s2673, 8
        %s2675 = scalar_lea.vmem %s3, %s2674
      $region44: #{up_block.1} parent=39 // pred_fallthru
        _
    $region40: #{up_block.1} parent=5 // pred_fallthru
      _
  $region6: #{up_block.1} parent=0 // loop_footer
    %s13 = sadd.s32 1, %s9
  $region7: #{up_block.1} parent=0 // loop_footer_branch
    %8 = sbr.rel target = $region3
  $region8: #{up_block.1} parent=0 // loop_exit
    _

</llo_original>
